<compile_context>
chip_gen: v6e
topology: v6e:2x2x1
jax: 0.10.0
libtpu: 0.0.40
codegen_flags: <defaults>
</compile_context>

<pallas_src>
import math

import jax
import jax.numpy as jnp
from jax import lax
from jax.experimental import pallas as pl
from jax.experimental.pallas import tpu as pltpu


def make_mha_kernel(num_heads, head_dim, seq_len, hidden, tq, compute_dtype):
    scale = 1.0 / math.sqrt(float(head_dim))

    def mha_kernel(x_ref, wq_ref, wk_ref, wv_ref, wo_ref,
                   bq_ref, bk_ref, bv_ref, bo_ref,
                   o_ref, k_ref, v_ref):
        qi = pl.program_id(1)

        # ---- K / V projections for the whole sequence: once per batch element. ----
        # x_ref holds the full (S, H) sequence for this batch element; its block index only
        # changes with the batch axis, so it is not re-DMA'd across query tiles.
        @pl.when(qi == 0)
        def _():
            xs = x_ref[...].astype(compute_dtype)
            k_ref[...] = (jnp.dot(xs, wk_ref[...], preferred_element_type=jnp.float32)
                          + bk_ref[...]).astype(compute_dtype)
            v_ref[...] = (jnp.dot(xs, wv_ref[...], preferred_element_type=jnp.float32)
                          + bv_ref[...]).astype(compute_dtype)

        # ---- Q projection for this query tile only (sliced from the resident x block). ----
        row0 = pl.multiple_of(qi * tq, tq)
        xq = x_ref[pl.ds(row0, tq), :].astype(compute_dtype)
        # 1/sqrt(d) is folded into q (tq*H mults instead of tq*S per head).  NOTE: if an
        # additive causal mask on the scores is added later it must NOT be scaled.
        q = ((jnp.dot(xq, wq_ref[...], preferred_element_type=jnp.float32)
              + bq_ref[...]) * scale).astype(compute_dtype)

        # ---- Per-head attention, accumulating the output projection directly. ----
        # TODO(synk): for long S, tile KV flash-style (online-softmax m/l/acc scratch) instead
        # of materialising full (tq, S) scores and an (S, H) K/V scratch; and for many heads
        # with head_dim < 128, batch heads in one 3-D dot_general to cut unrolled-loop overhead.
        acc = jnp.zeros((tq, hidden), jnp.float32)
        for h in range(num_heads):
            lo = h * head_dim
            hi = lo + head_dim
            qh = q[:, lo:hi]                       # (tq, d)
            kh = k_ref[:, lo:hi]                   # (S,  d)  -- persistent scratch, read-only
            vh = v_ref[:, lo:hi]                   # (S,  d)
            # qh @ kh.T without materialising a transposed copy: contract the last dims.
            scores = lax.dot_general(
                qh, kh, dimension_numbers=(((1,), (1,)), ((), ())),
                preferred_element_type=jnp.float32)                    # (tq, S)
            m = jnp.max(scores, axis=-1, keepdims=True)
            e = jnp.exp(scores - m)
            probs = e / jnp.sum(e, axis=-1, keepdims=True)             # exact softmax
            ctx_h = jnp.dot(probs.astype(compute_dtype), vh,
                            preferred_element_type=jnp.float32)        # (tq, d)
            # Fold this head straight into the output projection: lane-dense (tq, H) accumulate,
            # no ctx scratch round-trip, MXU output width = H.
            acc = acc + jnp.dot(ctx_h.astype(compute_dtype), wo_ref[lo:hi, :],
                                preferred_element_type=jnp.float32)

        o_ref[...] = (acc + bo_ref[...]).astype(o_ref.dtype)

    return mha_kernel


def _pick_query_tile(seq_len):
    """Largest sublane-aligned query tile: whole S when short, else a multiple-of-8 divisor."""
    if seq_len <= 512:
        return seq_len
    for cand in range(512, 7, -1):
        if cand % 8 == 0 and seq_len % cand == 0:
            return cand
    # TODO(synk): pad S up to a multiple of 8/128 in the wrapper (and mask the tail) instead of
    # this single-whole-sequence fallback for awkward long sequence lengths.
    return seq_len


def multi_head_attention(hidden_state, params, num_heads, *, compute_dtype=jnp.float32):
    """Fused q/k/v/o projections + scaled-dot-product attention.

    hidden_state: (B, S, H).  params: (H, H) weights stored as (in, out) == PyTorch weight.T,
    (1, H) biases.  compute_dtype: MXU operand dtype -- pass jnp.bfloat16 on v6e/v7x
    (accumulation stays f32); default f32 keeps bit-tight accuracy.
    """
    B, S, H = hidden_state.shape
    assert H % num_heads == 0, "hidden_size must be divisible by num_heads"
    head_dim = H // num_heads

    tq = _pick_query_tile(S)
    assert S % tq == 0
    n_q_tiles = S // tq

    x = hidden_state.astype(compute_dtype)
    wq, wk, wv, wo = (params[n].astype(compute_dtype) for n in ("wq", "wk", "wv", "wo"))
    bq, bk, bv, bo = (params[n].astype(jnp.float32) for n in ("bq", "bk", "bv", "bo"))

    kernel = make_mha_kernel(num_heads, head_dim, S, H, tq, compute_dtype)

    # Grid-invariant operands (constant index_map) -- copied once, kept resident.
    w_spec = pl.BlockSpec((H, H), lambda b, qi: (0, 0))
    b_spec = pl.BlockSpec((1, H), lambda b, qi: (0, 0))
    # Full-sequence x block: only changes with the batch axis (query rows sliced in-kernel).
    x_spec = pl.BlockSpec((None, S, H), lambda b, qi: (b, 0, 0))
    o_spec = pl.BlockSpec((None, tq, H), lambda b, qi: (b, qi, 0))

    return pl.pallas_call(
        kernel,
        out_shape=jax.ShapeDtypeStruct((B, S, H), hidden_state.dtype),
        grid_spec=pltpu.PrefetchScalarGridSpec(
            num_scalar_prefetch=0,
            grid=(B, n_q_tiles),
            in_specs=[x_spec, w_spec, w_spec, w_spec, w_spec,
                      b_spec, b_spec, b_spec, b_spec],
            out_specs=o_spec,
            # Persistent per-batch-element K / V scratch, written at qi == 0.
            scratch_shapes=[pltpu.VMEM((S, H), compute_dtype),
                            pltpu.VMEM((S, H), compute_dtype)],
        ),
        # qi must stay "arbitrary": the qi == 0 step initialises the K/V scratch that the other
        # query tiles of the same batch element consume (matters on 2-TensorCore chips / v7x).
        # 64 MiB scoped VMEM is <= physical on all of v5e/v6e/v7x; raise toward ~100 MiB on
        # v5e/v6e if larger tq tiles are used.
        compiler_params=pltpu.CompilerParams(
            dimension_semantics=("parallel", "arbitrary"),
            vmem_limit_bytes=64 * 1024 * 1024,
        ),
    )(x, wq, wk, wv, wo, bq, bk, bv, bo)


# TODO(synk): causal_mask / past_key_value / use_cache optional paths are not exercised here
# (module defaults: causal_mask=None, use_cache=False); an additive mask before softmax and a
# K/V concat in the wrapper would be straightforward extensions.


def reference_mha(x, params, num_heads):
    """Pure-JAX reference matching the PyTorch module semantics (HIGHEST matmul precision)."""
    B, S, H = x.shape
    d = H // num_heads
    hp = jax.lax.Precision.HIGHEST
    q = jnp.einsum("bsh,hk->bsk", x, params["wq"], precision=hp) + params["bq"]
    k = jnp.einsum("bsh,hk->bsk", x, params["wk"], precision=hp) + params["bk"]
    v = jnp.einsum("bsh,hk->bsk", x, params["wv"], precision=hp) + params["bv"]

    def split(t):  # (B,S,H) -> (B,nh,S,d)
        return t.reshape(B, S, num_heads, d).transpose(0, 2, 1, 3)

    qh, kh, vh = split(q), split(k), split(v)
    scores = jnp.einsum("bhqd,bhkd->bhqk", qh, kh, precision=hp) / jnp.sqrt(jnp.float32(d))
    probs = jax.nn.softmax(scores, axis=-1)
    ctx = jnp.einsum("bhqk,bhkd->bhqd", probs, vh, precision=hp)
    ctx = ctx.transpose(0, 2, 1, 3).reshape(B, S, H)
    return jnp.einsum("bsh,hk->bsk", ctx, params["wo"], precision=hp) + params["bo"]


if __name__ == "__main__":
    B, S, H, NH = 2, 8, 32, 4

    key = jax.random.PRNGKey(0)
    ks = jax.random.split(key, 9)
    # nn.Linear default init ~ U(-1/sqrt(in), 1/sqrt(in)); deterministic synthetic params.
    bound = 1.0 / math.sqrt(H)

    def w(k):  # stored as (in, out) == PyTorch weight.T
        return jax.random.uniform(k, (H, H), jnp.float32, -bound, bound)

    def b(k):
        return jax.random.uniform(k, (1, H), jnp.float32, -bound, bound)

    params = {
        "wq": w(ks[0]), "wk": w(ks[1]), "wv": w(ks[2]), "wo": w(ks[3]),
        "bq": b(ks[4]), "bk": b(ks[5]), "bv": b(ks[6]), "bo": b(ks[7]),
    }
    x = jax.random.normal(ks[8], (B, S, H), jnp.float32)

    ref = reference_mha(x, params, NH)

    # f32 MXU operands (v5e-friendly path); exact softmax -> tight tolerance.
    out = jax.block_until_ready(multi_head_attention(x, params, NH))
    assert out.shape == (B, S, H)
    assert jnp.allclose(out, ref, atol=1e-3, rtol=1e-3), "f32 kernel mismatch vs reference"

    # bf16 MXU operands with f32 accumulation (recommended mode on v6e / v7x).
    out_bf16 = jax.block_until_ready(
        multi_head_attention(x, params, NH, compute_dtype=jnp.bfloat16))
    assert jnp.allclose(out_bf16, ref, atol=5e-2, rtol=5e-2), "bf16 kernel mismatch vs reference"

    print("KERNEL_OK")
</pallas_src>

<mosaic_0001>
module attributes {stable_mosaic.version = 11 : i64} {
  func.func @mha_kernel(%arg0: i32, %arg1: i32, %arg2: memref<1x8x32xf32, #tpu.memory_space<vmem>>, %arg3: memref<32x32xf32, #tpu.memory_space<vmem>>, %arg4: memref<32x32xf32, #tpu.memory_space<vmem>>, %arg5: memref<32x32xf32, #tpu.memory_space<vmem>>, %arg6: memref<32x32xf32, #tpu.memory_space<vmem>>, %arg7: memref<1x32xf32, #tpu.memory_space<vmem>>, %arg8: memref<1x32xf32, #tpu.memory_space<vmem>>, %arg9: memref<1x32xf32, #tpu.memory_space<vmem>>, %arg10: memref<1x32xf32, #tpu.memory_space<vmem>>, %arg11: memref<1x8x32xf32, #tpu.memory_space<vmem>>, %arg12: memref<8x32xf32, #tpu.memory_space<vmem>>, %arg13: memref<8x32xf32, #tpu.memory_space<vmem>>) attributes {dimension_semantics = [#tpu.dimension_semantics<parallel>, #tpu.dimension_semantics<arbitrary>], iteration_bounds = array<i64: 2, 1>, scalar_prefetch = 0 : i64, scratch_operands = 2 : i64, tpu.core_type = #tpu.core_type<tc>, window_params = [{transform_indices = @transform_0, window_bounds = array<i64: 1, 8, 32>}, {pipeline_mode = #tpu.pipeline_mode<synchronous>, transform_indices = @transform_1, window_bounds = array<i64: 32, 32>}, {pipeline_mode = #tpu.pipeline_mode<synchronous>, transform_indices = @transform_2, window_bounds = array<i64: 32, 32>}, {pipeline_mode = #tpu.pipeline_mode<synchronous>, transform_indices = @transform_3, window_bounds = array<i64: 32, 32>}, {pipeline_mode = #tpu.pipeline_mode<synchronous>, transform_indices = @transform_4, window_bounds = array<i64: 32, 32>}, {pipeline_mode = #tpu.pipeline_mode<synchronous>, transform_indices = @transform_5, window_bounds = array<i64: 1, 32>}, {pipeline_mode = #tpu.pipeline_mode<synchronous>, transform_indices = @transform_6, window_bounds = array<i64: 1, 32>}, {pipeline_mode = #tpu.pipeline_mode<synchronous>, transform_indices = @transform_7, window_bounds = array<i64: 1, 32>}, {pipeline_mode = #tpu.pipeline_mode<synchronous>, transform_indices = @transform_8, window_bounds = array<i64: 1, 32>}, {transform_indices = @transform_9, window_bounds = array<i64: 1, 8, 32>}]} {
    %c0_i32 = arith.constant 0 : i32
    %0 = arith.cmpi eq, %arg1, %c0_i32 : i32
    %1 = arith.extui %0 : i1 to i32
    %c0_i32_0 = arith.constant 0 : i32
    %2 = arith.cmpi ne, %1, %c0_i32_0 : i32
    scf.if %2 {
      %c0_54 = arith.constant 0 : index
      %c0_55 = arith.constant 0 : index
      %c0_56 = arith.constant 0 : index
      %90 = vector.load %arg2[%c0_54, %c0_55, %c0_56] : memref<1x8x32xf32, #tpu.memory_space<vmem>>, vector<1x8x32xf32>
      %91 = vector.shape_cast %90 : vector<1x8x32xf32> to vector<8x32xf32>
      %c0_57 = arith.constant 0 : index
      %c0_58 = arith.constant 0 : index
      %92 = vector.load %arg4[%c0_57, %c0_58] : memref<32x32xf32, #tpu.memory_space<vmem>>, vector<32x32xf32>
      %cst_59 = arith.constant dense<0.000000e+00> : vector<8x32xf32>
      %93 = tpu.matmul %91, %92, %cst_59 {dimension_numbers = #tpu.dot_dimension_numbers<[1], [0], [0], [1], [0, 0, 1, 1], [], []>} : vector<8x32xf32>, vector<32x32xf32>, vector<8x32xf32> -> vector<8x32xf32>
      %c0_60 = arith.constant 0 : index
      %c0_61 = arith.constant 0 : index
      %94 = vector.load %arg8[%c0_60, %c0_61] : memref<1x32xf32, #tpu.memory_space<vmem>>, vector<1x32xf32>
      %95 = vector.broadcast %94 : vector<1x32xf32> to vector<8x32xf32>
      %96 = arith.addf %93, %95 : vector<8x32xf32>
      %c0_62 = arith.constant 0 : index
      %c0_63 = arith.constant 0 : index
      %97 = vector.load %arg12[%c0_62, %c0_63] : memref<8x32xf32, #tpu.memory_space<vmem>>, vector<8x32xf32>
      tpu.vector_store %arg12[%c0_62, %c0_63], %96 {strides = array<i32>} : memref<8x32xf32, #tpu.memory_space<vmem>>, vector<8x32xf32>,
      %c0_64 = arith.constant 0 : index
      %c0_65 = arith.constant 0 : index
      %98 = vector.load %arg5[%c0_64, %c0_65] : memref<32x32xf32, #tpu.memory_space<vmem>>, vector<32x32xf32>
      %cst_66 = arith.constant dense<0.000000e+00> : vector<8x32xf32>
      %99 = tpu.matmul %91, %98, %cst_66 {dimension_numbers = #tpu.dot_dimension_numbers<[1], [0], [0], [1], [0, 0, 1, 1], [], []>} : vector<8x32xf32>, vector<32x32xf32>, vector<8x32xf32> -> vector<8x32xf32>
      %c0_67 = arith.constant 0 : index
      %c0_68 = arith.constant 0 : index
      %100 = vector.load %arg9[%c0_67, %c0_68] : memref<1x32xf32, #tpu.memory_space<vmem>>, vector<1x32xf32>
      %101 = vector.broadcast %100 : vector<1x32xf32> to vector<8x32xf32>
      %102 = arith.addf %99, %101 : vector<8x32xf32>
      %c0_69 = arith.constant 0 : index
      %c0_70 = arith.constant 0 : index
      %103 = vector.load %arg13[%c0_69, %c0_70] : memref<8x32xf32, #tpu.memory_space<vmem>>, vector<8x32xf32>
      tpu.vector_store %arg13[%c0_69, %c0_70], %102 {strides = array<i32>} : memref<8x32xf32, #tpu.memory_space<vmem>>, vector<8x32xf32>,
    } else {
    }
    %c8_i32 = arith.constant 8 : i32
    %3 = arith.muli %arg1, %c8_i32 : i32
    %4 = tpu.assume_multiple %3, 8 : i32
    %c0 = arith.constant 0 : index
    %5 = arith.index_cast %4 : i32 to index
    %c0_1 = arith.constant 0 : index
    %6 = vector.load %arg2[%c0, %5, %c0_1] : memref<1x8x32xf32, #tpu.memory_space<vmem>>, vector<1x8x32xf32>
    %7 = vector.shape_cast %6 : vector<1x8x32xf32> to vector<8x32xf32>
    %c0_2 = arith.constant 0 : index
    %c0_3 = arith.constant 0 : index
    %8 = vector.load %arg3[%c0_2, %c0_3] : memref<32x32xf32, #tpu.memory_space<vmem>>, vector<32x32xf32>
    %cst = arith.constant dense<0.000000e+00> : vector<8x32xf32>
    %9 = tpu.matmul %7, %8, %cst {dimension_numbers = #tpu.dot_dimension_numbers<[1], [0], [0], [1], [0, 0, 1, 1], [], []>} : vector<8x32xf32>, vector<32x32xf32>, vector<8x32xf32> -> vector<8x32xf32>
    %c0_4 = arith.constant 0 : index
    %c0_5 = arith.constant 0 : index
    %10 = vector.load %arg7[%c0_4, %c0_5] : memref<1x32xf32, #tpu.memory_space<vmem>>, vector<1x32xf32>
    %11 = vector.broadcast %10 : vector<1x32xf32> to vector<8x32xf32>
    %12 = arith.addf %9, %11 : vector<8x32xf32>
    %cst_6 = arith.constant 0.353553385 : f32
    %13 = vector.broadcast %cst_6 : f32 to vector<8x32xf32>
    %14 = arith.mulf %12, %13 : vector<8x32xf32>
    %cst_7 = arith.constant 0.000000e+00 : f32
    %15 = vector.broadcast %cst_7 : f32 to vector<8x32xf32>
    %16 = vector.extract_strided_slice %14 {offsets = [0, 0], sizes = [8, 8], strides = [1, 1]} : vector<8x32xf32> to vector<8x8xf32>
    %c0_8 = arith.constant 0 : index
    %c0_9 = arith.constant 0 : index
    %17 = vector.load %arg12[%c0_8, %c0_9] : memref<8x32xf32, #tpu.memory_space<vmem>>, vector<8x8xf32>
    %c0_10 = arith.constant 0 : index
    %c0_11 = arith.constant 0 : index
    %18 = vector.load %arg13[%c0_10, %c0_11] : memref<8x32xf32, #tpu.memory_space<vmem>>, vector<8x8xf32>
    %cst_12 = arith.constant dense<0.000000e+00> : vector<8x8xf32>
    %19 = tpu.matmul %16, %17, %cst_12 {dimension_numbers = #tpu.dot_dimension_numbers<[1], [1], [0], [0], [0, 0, 1, 0], [], []>} : vector<8x8xf32>, vector<8x8xf32>, vector<8x8xf32> -> vector<8x8xf32>
    %cst_13 = arith.constant dense<0xFF800000> : vector<8xf32>
    %20 = vector.multi_reduction <maximumf>, %19, %cst_13 [1] : vector<8x8xf32> to vector<8xf32>
    %21 = vector.shape_cast %20 : vector<8xf32> to vector<8x1xf32>
    %22 = vector.broadcast %21 : vector<8x1xf32> to vector<8x8xf32>
    %23 = arith.subf %19, %22 : vector<8x8xf32>
    %24 = math.exp %23 : vector<8x8xf32>
    %cst_14 = arith.constant dense<0.000000e+00> : vector<8xf32>
    %25 = vector.multi_reduction <add>, %24, %cst_14 [1] : vector<8x8xf32> to vector<8xf32>
    %26 = vector.shape_cast %25 : vector<8xf32> to vector<8x1xf32>
    %27 = vector.broadcast %26 : vector<8x1xf32> to vector<8x8xf32>
    %28 = arith.divf %24, %27 : vector<8x8xf32>
    %cst_15 = arith.constant dense<0.000000e+00> : vector<8x8xf32>
    %29 = tpu.matmul %28, %18, %cst_15 {dimension_numbers = #tpu.dot_dimension_numbers<[1], [0], [0], [1], [0, 0, 1, 1], [], []>} : vector<8x8xf32>, vector<8x8xf32>, vector<8x8xf32> -> vector<8x8xf32>
    %c0_16 = arith.constant 0 : index
    %c0_17 = arith.constant 0 : index
    %30 = vector.load %arg6[%c0_16, %c0_17] : memref<32x32xf32, #tpu.memory_space<vmem>>, vector<8x32xf32>
    %cst_18 = arith.constant dense<0.000000e+00> : vector<8x32xf32>
    %31 = tpu.matmul %29, %30, %cst_18 {dimension_numbers = #tpu.dot_dimension_numbers<[1], [0], [0], [1], [0, 0, 1, 1], [], []>} : vector<8x8xf32>, vector<8x32xf32>, vector<8x32xf32> -> vector<8x32xf32>
    %32 = arith.addf %15, %31 : vector<8x32xf32>
    %33 = vector.extract_strided_slice %14 {offsets = [0, 8], sizes = [8, 8], strides = [1, 1]} : vector<8x32xf32> to vector<8x8xf32>
    %c0_19 = arith.constant 0 : index
    %c8 = arith.constant 8 : index
    %34 = vector.load %arg12[%c0_19, %c8] : memref<8x32xf32, #tpu.memory_space<vmem>>, vector<8x8xf32>
    %c0_20 = arith.constant 0 : index
    %c8_21 = arith.constant 8 : index
    %35 = vector.load %arg13[%c0_20, %c8_21] : memref<8x32xf32, #tpu.memory_space<vmem>>, vector<8x8xf32>
    %cst_22 = arith.constant dense<0.000000e+00> : vector<8x8xf32>
    %36 = tpu.matmul %33, %34, %cst_22 {dimension_numbers = #tpu.dot_dimension_numbers<[1], [1], [0], [0], [0, 0, 1, 0], [], []>} : vector<8x8xf32>, vector<8x8xf32>, vector<8x8xf32> -> vector<8x8xf32>
    %cst_23 = arith.constant dense<0xFF800000> : vector<8xf32>
    %37 = vector.multi_reduction <maximumf>, %36, %cst_23 [1] : vector<8x8xf32> to vector<8xf32>
    %38 = vector.shape_cast %37 : vector<8xf32> to vector<8x1xf32>
    %39 = vector.broadcast %38 : vector<8x1xf32> to vector<8x8xf32>
    %40 = arith.subf %36, %39 : vector<8x8xf32>
    %41 = math.exp %40 : vector<8x8xf32>
    %cst_24 = arith.constant dense<0.000000e+00> : vector<8xf32>
    %42 = vector.multi_reduction <add>, %41, %cst_24 [1] : vector<8x8xf32> to vector<8xf32>
    %43 = vector.shape_cast %42 : vector<8xf32> to vector<8x1xf32>
    %44 = vector.broadcast %43 : vector<8x1xf32> to vector<8x8xf32>
    %45 = arith.divf %41, %44 : vector<8x8xf32>
    %cst_25 = arith.constant dense<0.000000e+00> : vector<8x8xf32>
    %46 = tpu.matmul %45, %35, %cst_25 {dimension_numbers = #tpu.dot_dimension_numbers<[1], [0], [0], [1], [0, 0, 1, 1], [], []>} : vector<8x8xf32>, vector<8x8xf32>, vector<8x8xf32> -> vector<8x8xf32>
    %c8_26 = arith.constant 8 : index
    %c0_27 = arith.constant 0 : index
    %47 = vector.load %arg6[%c8_26, %c0_27] : memref<32x32xf32, #tpu.memory_space<vmem>>, vector<8x32xf32>
    %cst_28 = arith.constant dense<0.000000e+00> : vector<8x32xf32>
    %48 = tpu.matmul %46, %47, %cst_28 {dimension_numbers = #tpu.dot_dimension_numbers<[1], [0], [0], [1], [0, 0, 1, 1], [], []>} : vector<8x8xf32>, vector<8x32xf32>, vector<8x32xf32> -> vector<8x32xf32>
    %49 = arith.addf %32, %48 : vector<8x32xf32>
    %50 = vector.extract_strided_slice %14 {offsets = [0, 16], sizes = [8, 8], strides = [1, 1]} : vector<8x32xf32> to vector<8x8xf32>
    %c0_29 = arith.constant 0 : index
    %c16 = arith.constant 16 : index
    %51 = vector.load %arg12[%c0_29, %c16] : memref<8x32xf32, #tpu.memory_space<vmem>>, vector<8x8xf32>
    %c0_30 = arith.constant 0 : index
    %c16_31 = arith.constant 16 : index
    %52 = vector.load %arg13[%c0_30, %c16_31] : memref<8x32xf32, #tpu.memory_space<vmem>>, vector<8x8xf32>
    %cst_32 = arith.constant dense<0.000000e+00> : vector<8x8xf32>
    %53 = tpu.matmul %50, %51, %cst_32 {dimension_numbers = #tpu.dot_dimension_numbers<[1], [1], [0], [0], [0, 0, 1, 0], [], []>} : vector<8x8xf32>, vector<8x8xf32>, vector<8x8xf32> -> vector<8x8xf32>
    %cst_33 = arith.constant dense<0xFF800000> : vector<8xf32>
    %54 = vector.multi_reduction <maximumf>, %53, %cst_33 [1] : vector<8x8xf32> to vector<8xf32>
    %55 = vector.shape_cast %54 : vector<8xf32> to vector<8x1xf32>
    %56 = vector.broadcast %55 : vector<8x1xf32> to vector<8x8xf32>
    %57 = arith.subf %53, %56 : vector<8x8xf32>
    %58 = math.exp %57 : vector<8x8xf32>
    %cst_34 = arith.constant dense<0.000000e+00> : vector<8xf32>
    %59 = vector.multi_reduction <add>, %58, %cst_34 [1] : vector<8x8xf32> to vector<8xf32>
    %60 = vector.shape_cast %59 : vector<8xf32> to vector<8x1xf32>
    %61 = vector.broadcast %60 : vector<8x1xf32> to vector<8x8xf32>
    %62 = arith.divf %58, %61 : vector<8x8xf32>
    %cst_35 = arith.constant dense<0.000000e+00> : vector<8x8xf32>
    %63 = tpu.matmul %62, %52, %cst_35 {dimension_numbers = #tpu.dot_dimension_numbers<[1], [0], [0], [1], [0, 0, 1, 1], [], []>} : vector<8x8xf32>, vector<8x8xf32>, vector<8x8xf32> -> vector<8x8xf32>
    %c16_36 = arith.constant 16 : index
    %c0_37 = arith.constant 0 : index
    %64 = vector.load %arg6[%c16_36, %c0_37] : memref<32x32xf32, #tpu.memory_space<vmem>>, vector<8x32xf32>
    %cst_38 = arith.constant dense<0.000000e+00> : vector<8x32xf32>
    %65 = tpu.matmul %63, %64, %cst_38 {dimension_numbers = #tpu.dot_dimension_numbers<[1], [0], [0], [1], [0, 0, 1, 1], [], []>} : vector<8x8xf32>, vector<8x32xf32>, vector<8x32xf32> -> vector<8x32xf32>
    %66 = arith.addf %49, %65 : vector<8x32xf32>
    %67 = vector.extract_strided_slice %14 {offsets = [0, 24], sizes = [8, 8], strides = [1, 1]} : vector<8x32xf32> to vector<8x8xf32>
    %c0_39 = arith.constant 0 : index
    %c24 = arith.constant 24 : index
    %68 = vector.load %arg12[%c0_39, %c24] : memref<8x32xf32, #tpu.memory_space<vmem>>, vector<8x8xf32>
    %c0_40 = arith.constant 0 : index
    %c24_41 = arith.constant 24 : index
    %69 = vector.load %arg13[%c0_40, %c24_41] : memref<8x32xf32, #tpu.memory_space<vmem>>, vector<8x8xf32>
    %cst_42 = arith.constant dense<0.000000e+00> : vector<8x8xf32>
    %70 = tpu.matmul %67, %68, %cst_42 {dimension_numbers = #tpu.dot_dimension_numbers<[1], [1], [0], [0], [0, 0, 1, 0], [], []>} : vector<8x8xf32>, vector<8x8xf32>, vector<8x8xf32> -> vector<8x8xf32>
    %cst_43 = arith.constant dense<0xFF800000> : vector<8xf32>
    %71 = vector.multi_reduction <maximumf>, %70, %cst_43 [1] : vector<8x8xf32> to vector<8xf32>
    %72 = vector.shape_cast %71 : vector<8xf32> to vector<8x1xf32>
    %73 = vector.broadcast %72 : vector<8x1xf32> to vector<8x8xf32>
    %74 = arith.subf %70, %73 : vector<8x8xf32>
    %75 = math.exp %74 : vector<8x8xf32>
    %cst_44 = arith.constant dense<0.000000e+00> : vector<8xf32>
    %76 = vector.multi_reduction <add>, %75, %cst_44 [1] : vector<8x8xf32> to vector<8xf32>
    %77 = vector.shape_cast %76 : vector<8xf32> to vector<8x1xf32>
    %78 = vector.broadcast %77 : vector<8x1xf32> to vector<8x8xf32>
    %79 = arith.divf %75, %78 : vector<8x8xf32>
    %cst_45 = arith.constant dense<0.000000e+00> : vector<8x8xf32>
    %80 = tpu.matmul %79, %69, %cst_45 {dimension_numbers = #tpu.dot_dimension_numbers<[1], [0], [0], [1], [0, 0, 1, 1], [], []>} : vector<8x8xf32>, vector<8x8xf32>, vector<8x8xf32> -> vector<8x8xf32>
    %c24_46 = arith.constant 24 : index
    %c0_47 = arith.constant 0 : index
    %81 = vector.load %arg6[%c24_46, %c0_47] : memref<32x32xf32, #tpu.memory_space<vmem>>, vector<8x32xf32>
    %cst_48 = arith.constant dense<0.000000e+00> : vector<8x32xf32>
    %82 = tpu.matmul %80, %81, %cst_48 {dimension_numbers = #tpu.dot_dimension_numbers<[1], [0], [0], [1], [0, 0, 1, 1], [], []>} : vector<8x8xf32>, vector<8x32xf32>, vector<8x32xf32> -> vector<8x32xf32>
    %83 = arith.addf %66, %82 : vector<8x32xf32>
    %c0_49 = arith.constant 0 : index
    %c0_50 = arith.constant 0 : index
    %84 = vector.load %arg10[%c0_49, %c0_50] : memref<1x32xf32, #tpu.memory_space<vmem>>, vector<1x32xf32>
    %85 = vector.broadcast %84 : vector<1x32xf32> to vector<8x32xf32>
    %86 = arith.addf %83, %85 : vector<8x32xf32>
    %c0_51 = arith.constant 0 : index
    %c0_52 = arith.constant 0 : index
    %c0_53 = arith.constant 0 : index
    %87 = vector.load %arg11[%c0_51, %c0_52, %c0_53] : memref<1x8x32xf32, #tpu.memory_space<vmem>>, vector<1x8x32xf32>
    %88 = vector.shape_cast %87 : vector<1x8x32xf32> to vector<8x32xf32>
    %89 = vector.shape_cast %86 : vector<8x32xf32> to vector<1x8x32xf32>
    tpu.vector_store %arg11[%c0_51, %c0_52, %c0_53], %89 {strides = array<i32>} : memref<1x8x32xf32, #tpu.memory_space<vmem>>, vector<1x8x32xf32>,
    return
  }
  func.func @transform_0(%arg0: i32, %arg1: i32) -> (i32, i32, i32) {
    %c0_i32 = arith.constant 0 : i32
    %c0_i32_0 = arith.constant 0 : i32
    %c0_i32_1 = arith.constant 0 : i32
    return %arg0, %c0_i32, %c0_i32_0 : i32, i32, i32
  }
  func.func @transform_1(%arg0: i32, %arg1: i32) -> (i32, i32) {
    %c0_i32 = arith.constant 0 : i32
    %c0_i32_0 = arith.constant 0 : i32
    %c0_i32_1 = arith.constant 0 : i32
    return %c0_i32, %c0_i32_0 : i32, i32
  }
  func.func @transform_2(%arg0: i32, %arg1: i32) -> (i32, i32) {
    %c0_i32 = arith.constant 0 : i32
    %c0_i32_0 = arith.constant 0 : i32
    %c0_i32_1 = arith.constant 0 : i32
    return %c0_i32, %c0_i32_0 : i32, i32
  }
  func.func @transform_3(%arg0: i32, %arg1: i32) -> (i32, i32) {
    %c0_i32 = arith.constant 0 : i32
    %c0_i32_0 = arith.constant 0 : i32
    %c0_i32_1 = arith.constant 0 : i32
    return %c0_i32, %c0_i32_0 : i32, i32
  }
  func.func @transform_4(%arg0: i32, %arg1: i32) -> (i32, i32) {
    %c0_i32 = arith.constant 0 : i32
    %c0_i32_0 = arith.constant 0 : i32
    %c0_i32_1 = arith.constant 0 : i32
    return %c0_i32, %c0_i32_0 : i32, i32
  }
  func.func @transform_5(%arg0: i32, %arg1: i32) -> (i32, i32) {
    %c0_i32 = arith.constant 0 : i32
    %c0_i32_0 = arith.constant 0 : i32
    %c0_i32_1 = arith.constant 0 : i32
    return %c0_i32, %c0_i32_0 : i32, i32
  }
  func.func @transform_6(%arg0: i32, %arg1: i32) -> (i32, i32) {
    %c0_i32 = arith.constant 0 : i32
    %c0_i32_0 = arith.constant 0 : i32
    %c0_i32_1 = arith.constant 0 : i32
    return %c0_i32, %c0_i32_0 : i32, i32
  }
  func.func @transform_7(%arg0: i32, %arg1: i32) -> (i32, i32) {
    %c0_i32 = arith.constant 0 : i32
    %c0_i32_0 = arith.constant 0 : i32
    %c0_i32_1 = arith.constant 0 : i32
    return %c0_i32, %c0_i32_0 : i32, i32
  }
  func.func @transform_8(%arg0: i32, %arg1: i32) -> (i32, i32) {
    %c0_i32 = arith.constant 0 : i32
    %c0_i32_0 = arith.constant 0 : i32
    %c0_i32_1 = arith.constant 0 : i32
    return %c0_i32, %c0_i32_0 : i32, i32
  }
  func.func @transform_9(%arg0: i32, %arg1: i32) -> (i32, i32, i32) {
    %c0_i32 = arith.constant 0 : i32
    %c0_i32_0 = arith.constant 0 : i32
    return %arg0, %arg1, %c0_i32 : i32, i32, i32
  }
}

</mosaic_0001>

<llo_original>
// kernel: tpu_custom_call.1
$region0: #{tpu_custom_call.1}
  #allocation0 [shape = 'u32[]', space=smem, size = 0x4, offset = 0x4, fixed_abs, tag = 'smem constant byte address 0x4 - core index']
  #allocation1 [shape = 'u32[144,128]{1,0:T(1,128)}', space=vmem, size = 0x12000, scoped, tag = 'internal scratch']
  #allocation2 [shape = 'f32[8,32]{1,0:T(8,128)}', space=vmem, size = 0x1000, scoped, tag = 'scratch operand']
  #allocation3 [shape = 'f32[8,32]{1,0:T(8,128)}', space=vmem, size = 0x1000, scoped, tag = 'scratch operand']
  %s0 = inlined_call_operand.hbm [shape: f32[2,8,32], index: 0, kind: input, shape index: {}]
  %s1 = inlined_call_operand.hbm [shape: f32[32,32], index: 1, kind: input, shape index: {}]
  %s2 = inlined_call_operand.hbm [shape: f32[32,32], index: 2, kind: input, shape index: {}]
  %s3 = inlined_call_operand.hbm [shape: f32[32,32], index: 3, kind: input, shape index: {}]
  %s4 = inlined_call_operand.hbm [shape: f32[32,32], index: 4, kind: input, shape index: {}]
  %s5 = inlined_call_operand.vmem [shape: f32[1,32], index: 5, kind: input, shape index: {}]
  %s6 = inlined_call_operand.vmem [shape: f32[1,32], index: 6, kind: input, shape index: {}]
  %s7 = inlined_call_operand.vmem [shape: f32[1,32], index: 7, kind: input, shape index: {}]
  %s8 = inlined_call_operand.vmem [shape: f32[1,32], index: 8, kind: input, shape index: {}]
  %s9 = inlined_call_operand.hbm [shape: f32[2,8,32], index: 9, kind: output, shape index: {}]
  %s10 = sld [smem:[#allocation0]]
  $region93: #{tpu_custom_call.1} parent=0
    _
  %s12 = ssub.s32 1, %s10
  %s13 = scalar_select 0, %s12, %s10
  $region1: #{tpu_custom_call.1} parent=0
    #allocation4 [shape = 'u8[8192]{0}', space=vmem, size = 0x2000, scoped, tag = 'input window, operand 0']
    #allocation5 [shape = 's32[2]{0}', space=sflag, size = 0x8, scoped, tag = 'scoped memory for tpu_custom_call.1']
    #allocation6 [shape = 's32[2]{0}', space=sflag, size = 0x8, scoped, tag = 'scoped memory for tpu_custom_call.1']
    #allocation7 [shape = 'u8[16384]{0}', space=vmem, size = 0x4000, scoped, tag = 'input window, operand 1, single buffered']
    #allocation8 [shape = 's32[1]{0}', space=sflag, size = 0x4, scoped, tag = 'scoped memory for tpu_custom_call.1']
    #allocation9 [shape = 'u8[16384]{0}', space=vmem, size = 0x4000, scoped, tag = 'input window, operand 2, single buffered']
    #allocation10 [shape = 'u8[16384]{0}', space=vmem, size = 0x4000, scoped, tag = 'input window, operand 3, single buffered']
    #allocation11 [shape = 's32[1]{0}', space=sflag, size = 0x4, scoped, tag = 'scoped memory for tpu_custom_call.1']
    #allocation12 [shape = 'u8[16384]{0}', space=vmem, size = 0x4000, scoped, tag = 'input window, operand 4, single buffered']
    #allocation13 [shape = 'u8[8192]{0}', space=vmem, size = 0x2000, scoped, tag = 'output window, operand 0']
    %14 = vsyncpa [#allocation5], 0
    %s15 = scalar_lea.sflag [#allocation5], 1
    %16 = vsyncpa %s15, 0
    %17 = vsyncpa [#allocation8], 0
    %18 = vsyncpa [#allocation11], 0
    %19 = vsyncpa [#allocation6], 0
    %s20 = scalar_lea.sflag [#allocation6], 1
    %21 = vsyncpa %s20, 0
    loop: start=0, step=1, limit=4
    $region2: #{tpu_custom_call.1} parent=1 // loop_pre_header
      _
    $region3: #{tpu_custom_call.1} parent=1 // loop_header
      %s23 = sphi 0, %s27
      %p24 = scmp.ge.s32.totalorder %s23, 4
      %s30 = sphi 0, %s42
      %s31 = sphi 0, %s38
      %s32 = sphi 0, %s30
      %s33 = sphi 0, %s31
      %s34 = sphi 0, %s32
      %s35 = sphi 0, %s33
      %s45 = sphi 0, %s47
      %s48 = sphi 0, %s45
      %s49 = sphi 0, %s48
      %s65 = sphi 0, %s49
      %s69 = sphi 0, %s69
      %s71 = sphi 0, %s69
      %s72 = sphi 0, %s71
      %s86 = sphi 0, %s72
      %s90 = sphi 0, %s90
      %s92 = sphi 0, %s90
      %s93 = sphi 0, %s92
      %s107 = sphi 0, %s93
      %s111 = sphi 0, %s111
      %s113 = sphi 0, %s111
      %s114 = sphi 0, %s113
      %s128 = sphi 0, %s114
      %s132 = sphi 0, %s132
      %s134 = sphi 0, %s132
      %s135 = sphi 0, %s134
      %s149 = sphi 0, %s135
      %s153 = sphi 0, %s153
      %s155 = sphi 0, %s153
      %s156 = sphi 0, %s155
      %s170 = sphi 0, %s156
      %s174 = sphi 0, %s174
      %s176 = sphi 0, %s174
      %s177 = sphi 0, %s176
      %s191 = sphi 0, %s177
      %s195 = sphi 0, %s195
      %s197 = sphi 0, %s195
      %s198 = sphi 0, %s197
      %s212 = sphi 0, %s198
      %s216 = sphi 0, %s216
      %s218 = sphi 0, %s216
      %s219 = sphi 0, %s218
      %s233 = sphi 0, %s219
      %s241 = sphi 0, %s243
      %s244 = sphi 0, %s241
      %s245 = sphi 0, %s244
      %s261 = sphi 0, %s245
    $region4: #{tpu_custom_call.1} parent=1 // loop_header_branch
      %26 = sbr.rel (%p24) target = $region8
    $region5: #{tpu_custom_call.1} parent=1 // loop_body
      %s28 = ssub.s32 %s23, 1
      %s29 = ssub.s32 %s23, 2
      %s36 = sadd.s32 1, %s31
      %p37 = scmp.ge.s32.totalorder %s36, 1
      %s38 = scalar_select %p37, 0, %s36
      %s39 = sadd.s32 1, %s30
      %s40 = scalar_select %p37, %s39, %s30
      %p41 = scmp.ge.s32.totalorder %s40, 2
      %s42 = scalar_select %p41, 0, %s40
      %s43 = ssub.s32 %s30, %s42
      %p44 = scmp.eq.s32.totalorder %s43, 0
      %s46 = sadd.s32 %s45, 1
      %s47 = scalar_select %p44, %s45, %s46
      %p50 = pneg %p44
      %p51 = scmp.eq.s32.totalorder %s23, 1
      %p52 = por %p50, %p51
      %p53 = scmp.ne.s32.totalorder %s45, %s48
      %p54 = scmp.eq.s32.totalorder %s23, 0
      %p55 = por %p53, %p54
      %p56 = scmp.ne.s32.totalorder %s45, %s48
      %p57 = scmp.eq.s32.totalorder %s28, 1
      %p58 = por %p56, %p57
      %p59 = scmp.ne.s32.totalorder %s48, %s49
      %p60 = scmp.eq.s32.totalorder %s28, 0
      %p61 = por %p59, %p60
      %p62 = scmp.ne.s32.totalorder %s48, %s49
      %p63 = scmp.eq.s32.totalorder %s29, 1
      %p64 = por %p62, %p63
      %p66 = scmp.ne.s32.totalorder %s49, %s65
      %p67 = scmp.eq.s32.totalorder %s29, 0
      %p68 = por %p66, %p67
      %s70 = sadd.s32 %s69, 1
      %p73 = scmp.eq.s32.totalorder %s23, 1
      %p74 = scmp.ne.s32.totalorder %s69, %s71
      %p75 = scmp.eq.s32.totalorder %s23, 0
      %p76 = por %p74, %p75
      %p77 = scmp.ne.s32.totalorder %s69, %s71
      %p78 = scmp.eq.s32.totalorder %s28, 1
      %p79 = por %p77, %p78
      %p80 = scmp.ne.s32.totalorder %s71, %s72
      %p81 = scmp.eq.s32.totalorder %s28, 0
      %p82 = por %p80, %p81
      %p83 = scmp.ne.s32.totalorder %s71, %s72
      %p84 = scmp.eq.s32.totalorder %s29, 1
      %p85 = por %p83, %p84
      %p87 = scmp.ne.s32.totalorder %s72, %s86
      %p88 = scmp.eq.s32.totalorder %s29, 0
      %p89 = por %p87, %p88
      %s91 = sadd.s32 %s90, 1
      %p94 = scmp.eq.s32.totalorder %s23, 1
      %p95 = scmp.ne.s32.totalorder %s90, %s92
      %p96 = scmp.eq.s32.totalorder %s23, 0
      %p97 = por %p95, %p96
      %p98 = scmp.ne.s32.totalorder %s90, %s92
      %p99 = scmp.eq.s32.totalorder %s28, 1
      %p100 = por %p98, %p99
      %p101 = scmp.ne.s32.totalorder %s92, %s93
      %p102 = scmp.eq.s32.totalorder %s28, 0
      %p103 = por %p101, %p102
      %p104 = scmp.ne.s32.totalorder %s92, %s93
      %p105 = scmp.eq.s32.totalorder %s29, 1
      %p106 = por %p104, %p105
      %p108 = scmp.ne.s32.totalorder %s93, %s107
      %p109 = scmp.eq.s32.totalorder %s29, 0
      %p110 = por %p108, %p109
      %s112 = sadd.s32 %s111, 1
      %p115 = scmp.eq.s32.totalorder %s23, 1
      %p116 = scmp.ne.s32.totalorder %s111, %s113
      %p117 = scmp.eq.s32.totalorder %s23, 0
      %p118 = por %p116, %p117
      %p119 = scmp.ne.s32.totalorder %s111, %s113
      %p120 = scmp.eq.s32.totalorder %s28, 1
      %p121 = por %p119, %p120
      %p122 = scmp.ne.s32.totalorder %s113, %s114
      %p123 = scmp.eq.s32.totalorder %s28, 0
      %p124 = por %p122, %p123
      %p125 = scmp.ne.s32.totalorder %s113, %s114
      %p126 = scmp.eq.s32.totalorder %s29, 1
      %p127 = por %p125, %p126
      %p129 = scmp.ne.s32.totalorder %s114, %s128
      %p130 = scmp.eq.s32.totalorder %s29, 0
      %p131 = por %p129, %p130
      %s133 = sadd.s32 %s132, 1
      %p136 = scmp.eq.s32.totalorder %s23, 1
      %p137 = scmp.ne.s32.totalorder %s132, %s134
      %p138 = scmp.eq.s32.totalorder %s23, 0
      %p139 = por %p137, %p138
      %p140 = scmp.ne.s32.totalorder %s132, %s134
      %p141 = scmp.eq.s32.totalorder %s28, 1
      %p142 = por %p140, %p141
      %p143 = scmp.ne.s32.totalorder %s134, %s135
      %p144 = scmp.eq.s32.totalorder %s28, 0
      %p145 = por %p143, %p144
      %p146 = scmp.ne.s32.totalorder %s134, %s135
      %p147 = scmp.eq.s32.totalorder %s29, 1
      %p148 = por %p146, %p147
      %p150 = scmp.ne.s32.totalorder %s135, %s149
      %p151 = scmp.eq.s32.totalorder %s29, 0
      %p152 = por %p150, %p151
      %s154 = sadd.s32 %s153, 1
      %p157 = scmp.eq.s32.totalorder %s23, 1
      %p158 = scmp.ne.s32.totalorder %s153, %s155
      %p159 = scmp.eq.s32.totalorder %s23, 0
      %p160 = por %p158, %p159
      %p161 = scmp.ne.s32.totalorder %s153, %s155
      %p162 = scmp.eq.s32.totalorder %s28, 1
      %p163 = por %p161, %p162
      %p164 = scmp.ne.s32.totalorder %s155, %s156
      %p165 = scmp.eq.s32.totalorder %s28, 0
      %p166 = por %p164, %p165
      %p167 = scmp.ne.s32.totalorder %s155, %s156
      %p168 = scmp.eq.s32.totalorder %s29, 1
      %p169 = por %p167, %p168
      %p171 = scmp.ne.s32.totalorder %s156, %s170
      %p172 = scmp.eq.s32.totalorder %s29, 0
      %p173 = por %p171, %p172
      %s175 = sadd.s32 %s174, 1
      %p178 = scmp.eq.s32.totalorder %s23, 1
      %p179 = scmp.ne.s32.totalorder %s174, %s176
      %p180 = scmp.eq.s32.totalorder %s23, 0
      %p181 = por %p179, %p180
      %p182 = scmp.ne.s32.totalorder %s174, %s176
      %p183 = scmp.eq.s32.totalorder %s28, 1
      %p184 = por %p182, %p183
      %p185 = scmp.ne.s32.totalorder %s176, %s177
      %p186 = scmp.eq.s32.totalorder %s28, 0
      %p187 = por %p185, %p186
      %p188 = scmp.ne.s32.totalorder %s176, %s177
      %p189 = scmp.eq.s32.totalorder %s29, 1
      %p190 = por %p188, %p189
      %p192 = scmp.ne.s32.totalorder %s177, %s191
      %p193 = scmp.eq.s32.totalorder %s29, 0
      %p194 = por %p192, %p193
      %s196 = sadd.s32 %s195, 1
      %p199 = scmp.eq.s32.totalorder %s23, 1
      %p200 = scmp.ne.s32.totalorder %s195, %s197
      %p201 = scmp.eq.s32.totalorder %s23, 0
      %p202 = por %p200, %p201
      %p203 = scmp.ne.s32.totalorder %s195, %s197
      %p204 = scmp.eq.s32.totalorder %s28, 1
      %p205 = por %p203, %p204
      %p206 = scmp.ne.s32.totalorder %s197, %s198
      %p207 = scmp.eq.s32.totalorder %s28, 0
      %p208 = por %p206, %p207
      %p209 = scmp.ne.s32.totalorder %s197, %s198
      %p210 = scmp.eq.s32.totalorder %s29, 1
      %p211 = por %p209, %p210
      %p213 = scmp.ne.s32.totalorder %s198, %s212
      %p214 = scmp.eq.s32.totalorder %s29, 0
      %p215 = por %p213, %p214
      %s217 = sadd.s32 %s216, 1
      %p220 = scmp.eq.s32.totalorder %s23, 1
      %p221 = scmp.ne.s32.totalorder %s216, %s218
      %p222 = scmp.eq.s32.totalorder %s23, 0
      %p223 = por %p221, %p222
      %p224 = scmp.ne.s32.totalorder %s216, %s218
      %p225 = scmp.eq.s32.totalorder %s28, 1
      %p226 = por %p224, %p225
      %p227 = scmp.ne.s32.totalorder %s218, %s219
      %p228 = scmp.eq.s32.totalorder %s28, 0
      %p229 = por %p227, %p228
      %p230 = scmp.ne.s32.totalorder %s218, %s219
      %p231 = scmp.eq.s32.totalorder %s29, 1
      %p232 = por %p230, %p231
      %p234 = scmp.ne.s32.totalorder %s219, %s233
      %p235 = scmp.eq.s32.totalorder %s29, 0
      %p236 = por %p234, %p235
      %s237 = ssub.s32 %s30, %s42
      %s238 = ssub.s32 %s31, %s38
      %s239 = sor.u32 %s237, %s238
      %p240 = scmp.eq.s32.totalorder %s239, 0
      %s242 = sadd.s32 %s241, 1
      %s243 = scalar_select %p240, %s241, %s242
      %p246 = pneg %p240
      %p247 = scmp.eq.s32.totalorder %s23, 1
      %p248 = por %p246, %p247
      %p249 = scmp.ne.s32.totalorder %s241, %s244
      %p250 = scmp.eq.s32.totalorder %s23, 0
      %p251 = por %p249, %p250
      %p252 = scmp.ne.s32.totalorder %s241, %s244
      %p253 = scmp.eq.s32.totalorder %s28, 1
      %p254 = por %p252, %p253
      %p255 = scmp.ne.s32.totalorder %s244, %s245
      %p256 = scmp.eq.s32.totalorder %s28, 0
      %p257 = por %p255, %p256
      %p258 = scmp.ne.s32.totalorder %s244, %s245
      %p259 = scmp.eq.s32.totalorder %s29, 1
      %p260 = por %p258, %p259
      %p262 = scmp.ne.s32.totalorder %s245, %s261
      %p263 = scmp.eq.s32.totalorder %s29, 0
      %p264 = por %p262, %p263
      %p265 = scmp.le.s32.totalorder 1, %s23
      %p266 = scmp.lt.s32.totalorder %s23, 3
      %p267 = pnand %p265, %p266
      %p268 = pneg %p267
      // Predicated region
      $region9: #{tpu_custom_call.1} parent=5 // pred_check
        _
      $region10: #{tpu_custom_call.1} parent=5 // pred_check_branch
        %270 = sbr.rel (%p267) target = $region12
      $region11: #{tpu_custom_call.1} parent=5 // pred_region
        %s271 = ssub.s32 %s23, 1
        // Predicated region
        $region13: #{tpu_custom_call.1} parent=11 // pred_check
          %p272 = pneg %p82
        $region14: #{tpu_custom_call.1} parent=11 // pred_check_branch
          %274 = sbr.rel (%p272) target = $region16
        $region15: #{tpu_custom_call.1} parent=11 // pred_region
          %s276 = ssub.s32 512, 512
          %277 = vsyncadd [#allocation8], %s276
          %s278 = sshll.u32 [#allocation7], 4
          %s279 = int_to_ptr.vmem [resolvable:$true] %s278
          %284 = dma.hbm_to_vmem [thread:$0]  %s1, 512, %s279, [#allocation8], 128, 128, 8
        $region16: #{tpu_custom_call.1} parent=11 // pred_fallthru
          _
        // Predicated region
        $region17: #{tpu_custom_call.1} parent=11 // pred_check
          %p285 = pneg %p103
        $region18: #{tpu_custom_call.1} parent=11 // pred_check_branch
          %287 = sbr.rel (%p285) target = $region20
        $region19: #{tpu_custom_call.1} parent=11 // pred_region
          %s289 = ssub.s32 512, 512
          %290 = vsyncadd [#allocation8], %s289
          %s291 = sshll.u32 [#allocation9], 4
          %s292 = int_to_ptr.vmem [resolvable:$true] %s291
          %297 = dma.hbm_to_vmem [thread:$0]  %s2, 512, %s292, [#allocation8], 128, 128, 8
        $region20: #{tpu_custom_call.1} parent=11 // pred_fallthru
          _
        // Predicated region
        $region21: #{tpu_custom_call.1} parent=11 // pred_check
          %p298 = pneg %p124
        $region22: #{tpu_custom_call.1} parent=11 // pred_check_branch
          %300 = sbr.rel (%p298) target = $region24
        $region23: #{tpu_custom_call.1} parent=11 // pred_region
          %s302 = ssub.s32 512, 512
          %303 = vsyncadd [#allocation11], %s302
          %s304 = sshll.u32 [#allocation10], 4
          %s305 = int_to_ptr.vmem [resolvable:$true] %s304
          %310 = dma.hbm_to_vmem [thread:$0]  %s3, 512, %s305, [#allocation11], 128, 128, 8
        $region24: #{tpu_custom_call.1} parent=11 // pred_fallthru
          _
        // Predicated region
        $region25: #{tpu_custom_call.1} parent=11 // pred_check
          %p311 = pneg %p145
        $region26: #{tpu_custom_call.1} parent=11 // pred_check_branch
          %313 = sbr.rel (%p311) target = $region28
        $region27: #{tpu_custom_call.1} parent=11 // pred_region
          %s315 = ssub.s32 512, 512
          %316 = vsyncadd [#allocation11], %s315
          %s317 = sshll.u32 [#allocation12], 4
          %s318 = int_to_ptr.vmem [resolvable:$true] %s317
          %323 = dma.hbm_to_vmem [thread:$0]  %s4, 512, %s318, [#allocation11], 128, 128, 8
        $region28: #{tpu_custom_call.1} parent=11 // pred_fallthru
          _
        // Predicated region
        $region29: #{tpu_custom_call.1} parent=11 // pred_check
          %p324 = pneg %p166
        $region30: #{tpu_custom_call.1} parent=11 // pred_check_branch
          %326 = sbr.rel (%p324) target = $region32
        $region31: #{tpu_custom_call.1} parent=11 // pred_region
          _
        $region32: #{tpu_custom_call.1} parent=11 // pred_fallthru
          _
        // Predicated region
        $region33: #{tpu_custom_call.1} parent=11 // pred_check
          %p327 = pneg %p187
        $region34: #{tpu_custom_call.1} parent=11 // pred_check_branch
          %329 = sbr.rel (%p327) target = $region36
        $region35: #{tpu_custom_call.1} parent=11 // pred_region
          _
        $region36: #{tpu_custom_call.1} parent=11 // pred_fallthru
          _
        // Predicated region
        $region37: #{tpu_custom_call.1} parent=11 // pred_check
          %p330 = pneg %p208
        $region38: #{tpu_custom_call.1} parent=11 // pred_check_branch
          %332 = sbr.rel (%p330) target = $region40
        $region39: #{tpu_custom_call.1} parent=11 // pred_region
          _
        $region40: #{tpu_custom_call.1} parent=11 // pred_fallthru
          _
        // Predicated region
        $region41: #{tpu_custom_call.1} parent=11 // pred_check
          %p333 = pneg %p229
        $region42: #{tpu_custom_call.1} parent=11 // pred_check_branch
          %335 = sbr.rel (%p333) target = $region44
        $region43: #{tpu_custom_call.1} parent=11 // pred_region
          _
        $region44: #{tpu_custom_call.1} parent=11 // pred_fallthru
          _
      $region12: #{tpu_custom_call.1} parent=5 // pred_fallthru
        _
      %p336 = scmp.lt.s32.totalorder %s23, 2
      // Predicated region
      $region45: #{tpu_custom_call.1} parent=5 // pred_check
        %p337 = pneg %p336
      $region46: #{tpu_custom_call.1} parent=5 // pred_check_branch
        %339 = sbr.rel (%p337) target = $region48
      $region47: #{tpu_custom_call.1} parent=5 // pred_region
        // Predicated region
        $region49: #{tpu_custom_call.1} parent=47 // pred_check
          %p340 = pneg %p55
        $region50: #{tpu_custom_call.1} parent=47 // pred_check_branch
          %342 = sbr.rel (%p340) target = $region52
        $region51: #{tpu_custom_call.1} parent=47 // pred_region
          %s343 = sand.u32 %s45, 1
          %s344 = scalar_lea.sflag [#allocation5], %s343
          %s345 = sand.u32 %s45, 1
          %s346 = smul.addr %s345, 8
          %s347 = scalar_lea.vmem [#allocation4], %s346
          %s349 = ssub.s32 128, 128
          %350 = vsyncadd %s344, %s349
          %s351 = smul.addr %s30, 128
          %s352 = scalar_lea.hbm %s0, %s351
          %s354 = sshll.u32 %s347, 4
          %s355 = int_to_ptr.vmem [resolvable:$true] %s354
          %357 = dma.hbm_to_vmem [thread:$0]  %s352, 128, %s355, %s344
        $region52: #{tpu_custom_call.1} parent=47 // pred_fallthru
          _
      $region48: #{tpu_custom_call.1} parent=5 // pred_fallthru
        _
      %p358 = scmp.le.s32.totalorder 1, %s23
      %p359 = scmp.lt.s32.totalorder %s23, 3
      %p360 = pnand %p358, %p359
      %p361 = pneg %p360
      // Predicated region
      $region53: #{tpu_custom_call.1} parent=5 // pred_check
        _
      $region54: #{tpu_custom_call.1} parent=5 // pred_check_branch
        %363 = sbr.rel (%p360) target = $region56
      $region55: #{tpu_custom_call.1} parent=5 // pred_region
        %s364 = ssub.s32 %s23, 1
        %s365 = sand.u32 %s48, 1
        %s366 = scalar_lea.sflag [#allocation5], %s365
        %s367 = sand.u32 %s48, 1
        %s368 = smul.addr %s367, 8
        %s369 = scalar_lea.vmem [#allocation4], %s368
        // Predicated region
        $region57: #{tpu_custom_call.1} parent=55 // pred_check
          %p370 = pneg %p61
        $region58: #{tpu_custom_call.1} parent=55 // pred_check_branch
          %372 = sbr.rel (%p370) target = $region60
        $region59: #{tpu_custom_call.1} parent=55 // pred_region
          %373 = dma.done %s366, 128
        $region60: #{tpu_custom_call.1} parent=55 // pred_fallthru
          _
        // Predicated region
        $region61: #{tpu_custom_call.1} parent=55 // pred_check
          %p374 = pneg %p82
        $region62: #{tpu_custom_call.1} parent=55 // pred_check_branch
          %376 = sbr.rel (%p374) target = $region64
        $region63: #{tpu_custom_call.1} parent=55 // pred_region
          %377 = dma.done [#allocation8], 512
        $region64: #{tpu_custom_call.1} parent=55 // pred_fallthru
          _
        // Predicated region
        $region65: #{tpu_custom_call.1} parent=55 // pred_check
          %p378 = pneg %p103
        $region66: #{tpu_custom_call.1} parent=55 // pred_check_branch
          %380 = sbr.rel (%p378) target = $region68
        $region67: #{tpu_custom_call.1} parent=55 // pred_region
          %381 = dma.done [#allocation8], 512
        $region68: #{tpu_custom_call.1} parent=55 // pred_fallthru
          _
        // Predicated region
        $region69: #{tpu_custom_call.1} parent=55 // pred_check
          %p382 = pneg %p124
        $region70: #{tpu_custom_call.1} parent=55 // pred_check_branch
          %384 = sbr.rel (%p382) target = $region72
        $region71: #{tpu_custom_call.1} parent=55 // pred_region
          %385 = dma.done [#allocation11], 512
        $region72: #{tpu_custom_call.1} parent=55 // pred_fallthru
          _
        // Predicated region
        $region73: #{tpu_custom_call.1} parent=55 // pred_check
          %p386 = pneg %p145
        $region74: #{tpu_custom_call.1} parent=55 // pred_check_branch
          %388 = sbr.rel (%p386) target = $region76
        $region75: #{tpu_custom_call.1} parent=55 // pred_region
          %389 = dma.done [#allocation11], 512
        $region76: #{tpu_custom_call.1} parent=55 // pred_fallthru
          _
        %s390 = sand.u32 %s48, 1
        %s391 = scalar_lea.sflag [#allocation5], %s390
        %s392 = sand.u32 %s48, 1
        %s393 = smul.addr %s392, 8
        %s394 = scalar_lea.vmem [#allocation4], %s393
        %p395 = pneg %p61
        %p396 = pneg %p58
        %p397 = pneg %p82
        %p398 = pneg %p79
        %p399 = pneg %p103
        %p400 = pneg %p100
        %p401 = pneg %p124
        %p402 = pneg %p121
        %p403 = pneg %p145
        %p404 = pneg %p142
        %p405 = pneg %p166
        %p406 = pneg %p163
        %p407 = pneg %p187
        %p408 = pneg %p184
        %p409 = pneg %p208
        %p410 = pneg %p205
        %p411 = pneg %p229
        %p412 = pneg %p226
        %p413 = pneg %p257
        %p414 = pneg %p254
        %s415 = sand.u32 %s244, 1
        %s416 = scalar_lea.sflag [#allocation6], %s415
        %s417 = sand.u32 %s244, 1
        %s418 = smul.addr %s417, 8
        %s419 = scalar_lea.vmem [#allocation13], %s418
        %p420 = scmp.eq.s32.totalorder %s33, 0
        // Predicated region
        $region77: #{tpu_custom_call.1} parent=55 // pred_check
          %p421 = pneg %p420
        $region78: #{tpu_custom_call.1} parent=55 // pred_check_branch
          %423 = sbr.rel (%p421) target = $region80
        $region79: #{tpu_custom_call.1} parent=55 // pred_region
          %v424 = vld [vmem:[%s369] sm:$0xff]
          %v425 = vld [vmem:[#allocation9] sm:$0xff]
          %v426 = vld [vmem:[#allocation9 + $0x8] sm:$0xff]
          %v427 = vld [vmem:[#allocation9 + $0x10] sm:$0xff]
          %v428 = vld [vmem:[#allocation9 + $0x18] sm:$0xff]
          %v429 = vld [vmem:[%s6] sm:$0x1]
          %v431 = vlaneseq
          %v432 = vshrl.u32 %v431, 7
          %v433 = vsub.s32 0, %v432
          %v434 = vrot.slane %v429, %v433
          %vm436 = vcmask 261120
          %v438 = vsel %vm436, %v424, 0
          %440 = vmatprep.subr.mxu0 0.0
          %441 = vmatpush1.msra.mxu0 0.0
          %442 = vmatprep.subr.mxu0 0.0
          %443 = vmatpush1.msra.mxu0 0.0
          %444 = vmatprep.subr.mxu0 0.0
          %445 = vmatpush1.msra.mxu0 0.0
          %446 = vmatprep.subr.mxu0 0.0
          %447 = vmatpush1.msra.mxu0 0.0
          %448 = vmatprep.subr.mxu0 0.0
          %449 = vmatpush1.msra.mxu0 0.0
          %450 = vmatprep.subr.mxu0 0.0
          %451 = vmatpush1.msra.mxu0 0.0
          %452 = vmatprep.subr.mxu0 0.0
          %453 = vmatpush1.msra.mxu0 0.0
          %454 = vmatprep.subr.mxu0 0.0
          %455 = vmatpush1.msra.mxu0 0.0
          %456 = vmatprep.subr.mxu0 0.0
          %457 = vmatpush1.msra.mxu0 0.0
          %458 = vmatprep.subr.mxu0 0.0
          %459 = vmatpush1.msra.mxu0 0.0
          %460 = vmatprep.subr.mxu0 0.0
          %461 = vmatpush1.msra.mxu0 0.0
          %462 = vmatprep.subr.mxu0 0.0
          %463 = vmatpush1.msra.mxu0 0.0
          %464 = vmatprep.subr.mxu0 0.0
          %465 = vmatpush1.msra.mxu0 %v428
          %466 = vmatprep.subr.mxu0 0.0
          %467 = vmatpush1.msra.mxu0 %v427
          %468 = vmatprep.subr.mxu0 0.0
          %469 = vmatpush1.msra.mxu0 %v426
          %470 = vmatprep.subr.mxu0 0.0
          %471 = vmatpush1.msra.mxu0 %v425
          %472 = vmatprep.subr.mxu0 0.0
          %473 = vmatpush2.msra.mxu0 0.0
          %474 = vmatprep.subr.mxu0 0.0
          %475 = vmatpush2.msra.mxu0 0.0
          %476 = vmatprep.subr.mxu0 0.0
          %477 = vmatpush2.msra.mxu0 0.0
          %478 = vmatprep.subr.mxu0 0.0
          %479 = vmatpush2.msra.mxu0 0.0
          %480 = vmatprep.subr.mxu0 0.0
          %481 = vmatpush2.msra.mxu0 0.0
          %482 = vmatprep.subr.mxu0 0.0
          %483 = vmatpush2.msra.mxu0 0.0
          %484 = vmatprep.subr.mxu0 0.0
          %485 = vmatpush2.msra.mxu0 0.0
          %486 = vmatprep.subr.mxu0 0.0
          %487 = vmatpush2.msra.mxu0 0.0
          %488 = vmatprep.subr.mxu0 0.0
          %489 = vmatpush2.msra.mxu0 0.0
          %490 = vmatprep.subr.mxu0 0.0
          %491 = vmatpush2.msra.mxu0 0.0
          %492 = vmatprep.subr.mxu0 0.0
          %493 = vmatpush2.msra.mxu0 0.0
          %494 = vmatprep.subr.mxu0 0.0
          %495 = vmatpush2.msra.mxu0 0.0
          %496 = vmatprep.subr.mxu0 0.0
          %497 = vmatpush2.msra.mxu0 0.0
          %498 = vmatprep.subr.mxu0 0.0
          %499 = vmatpush2.msra.mxu0 0.0
          %500 = vmatprep.subr.mxu0 0.0
          %501 = vmatpush2.msra.mxu0 0.0
          %502 = vmatprep.subr.mxu0 0.0
          %503 = vmatpush2.msra.mxu0 0.0
          %504 = vmatprep.mubr.f32.mxu0 0.0
          %505 = vmatmul.mubr.f32.gmra.mxu0 %v438
          %v506 = vpop.f32.mrf.mxu0
          %v507 = vadd.f32 %v434, %v506
          %v508 = vpop.f32.mrf.mxu0
          %509 = vdwg.mxu0
          %510 = vst.msk [vmem:[#allocation2] sm:$0xff] %vm436, %v507
          %v511 = vld [vmem:[#allocation10] sm:$0xff]
          %v512 = vld [vmem:[#allocation10 + $0x8] sm:$0xff]
          %v513 = vld [vmem:[#allocation10 + $0x10] sm:$0xff]
          %v514 = vld [vmem:[#allocation10 + $0x18] sm:$0xff]
          %v515 = vld [vmem:[%s7] sm:$0x1]
          %v517 = vlaneseq
          %v518 = vshrl.u32 %v517, 7
          %v519 = vsub.s32 0, %v518
          %v520 = vrot.slane %v515, %v519
          %522 = vmatprep.subr.mxu0 0.0
          %523 = vmatpush1.msra.mxu0 0.0
          %524 = vmatprep.subr.mxu0 0.0
          %525 = vmatpush1.msra.mxu0 0.0
          %526 = vmatprep.subr.mxu0 0.0
          %527 = vmatpush1.msra.mxu0 0.0
          %528 = vmatprep.subr.mxu0 0.0
          %529 = vmatpush1.msra.mxu0 0.0
          %530 = vmatprep.subr.mxu0 0.0
          %531 = vmatpush1.msra.mxu0 0.0
          %532 = vmatprep.subr.mxu0 0.0
          %533 = vmatpush1.msra.mxu0 0.0
          %534 = vmatprep.subr.mxu0 0.0
          %535 = vmatpush1.msra.mxu0 0.0
          %536 = vmatprep.subr.mxu0 0.0
          %537 = vmatpush1.msra.mxu0 0.0
          %538 = vmatprep.subr.mxu0 0.0
          %539 = vmatpush1.msra.mxu0 0.0
          %540 = vmatprep.subr.mxu0 0.0
          %541 = vmatpush1.msra.mxu0 0.0
          %542 = vmatprep.subr.mxu0 0.0
          %543 = vmatpush1.msra.mxu0 0.0
          %544 = vmatprep.subr.mxu0 0.0
          %545 = vmatpush1.msra.mxu0 0.0
          %546 = vmatprep.subr.mxu0 0.0
          %547 = vmatpush1.msra.mxu0 %v514
          %548 = vmatprep.subr.mxu0 0.0
          %549 = vmatpush1.msra.mxu0 %v513
          %550 = vmatprep.subr.mxu0 0.0
          %551 = vmatpush1.msra.mxu0 %v512
          %552 = vmatprep.subr.mxu0 0.0
          %553 = vmatpush1.msra.mxu0 %v511
          %554 = vmatprep.subr.mxu0 0.0
          %555 = vmatpush2.msra.mxu0 0.0
          %556 = vmatprep.subr.mxu0 0.0
          %557 = vmatpush2.msra.mxu0 0.0
          %558 = vmatprep.subr.mxu0 0.0
          %559 = vmatpush2.msra.mxu0 0.0
          %560 = vmatprep.subr.mxu0 0.0
          %561 = vmatpush2.msra.mxu0 0.0
          %562 = vmatprep.subr.mxu0 0.0
          %563 = vmatpush2.msra.mxu0 0.0
          %564 = vmatprep.subr.mxu0 0.0
          %565 = vmatpush2.msra.mxu0 0.0
          %566 = vmatprep.subr.mxu0 0.0
          %567 = vmatpush2.msra.mxu0 0.0
          %568 = vmatprep.subr.mxu0 0.0
          %569 = vmatpush2.msra.mxu0 0.0
          %570 = vmatprep.subr.mxu0 0.0
          %571 = vmatpush2.msra.mxu0 0.0
          %572 = vmatprep.subr.mxu0 0.0
          %573 = vmatpush2.msra.mxu0 0.0
          %574 = vmatprep.subr.mxu0 0.0
          %575 = vmatpush2.msra.mxu0 0.0
          %576 = vmatprep.subr.mxu0 0.0
          %577 = vmatpush2.msra.mxu0 0.0
          %578 = vmatprep.subr.mxu0 0.0
          %579 = vmatpush2.msra.mxu0 0.0
          %580 = vmatprep.subr.mxu0 0.0
          %581 = vmatpush2.msra.mxu0 0.0
          %582 = vmatprep.subr.mxu0 0.0
          %583 = vmatpush2.msra.mxu0 0.0
          %584 = vmatprep.subr.mxu0 0.0
          %585 = vmatpush2.msra.mxu0 0.0
          %586 = vmatprep.mubr.f32.mxu0 0.0
          %587 = vmatmul.mubr.f32.gmra.mxu0 %v438
          %v588 = vpop.f32.mrf.mxu0
          %v589 = vadd.f32 %v520, %v588
          %v590 = vpop.f32.mrf.mxu0
          %591 = vdwg.mxu0
          %592 = vst.msk [vmem:[#allocation3] sm:$0xff] %vm436, %v589
        $region80: #{tpu_custom_call.1} parent=55 // pred_fallthru
          _
        %s593 = smul.u32 %s33, 8
        %s594 = scalar_lea.vmem %s369, %s593 [#allocation4]
        %v595 = vld [vmem:[%s594] sm:$0xff]
        %v596 = vld [vmem:[#allocation7] sm:$0xff]
        %v597 = vld [vmem:[#allocation7 + $0x8] sm:$0xff]
        %v598 = vld [vmem:[#allocation7 + $0x10] sm:$0xff]
        %v599 = vld [vmem:[#allocation7 + $0x18] sm:$0xff]
        %v600 = vld [vmem:[%s5] sm:$0x1]
        %v602 = vlaneseq
        %v603 = vshrl.u32 %v602, 7
        %v604 = vsub.s32 0, %v603
        %v605 = vrot.slane %v600, %v604
        %vm607 = vcmask 261120
        %v609 = vsel %vm607, %v595, 0
        %611 = vmatprep.subr.mxu0 0.0
        %612 = vmatpush1.msra.mxu0 0.0
        %613 = vmatprep.subr.mxu0 0.0
        %614 = vmatpush1.msra.mxu0 0.0
        %615 = vmatprep.subr.mxu0 0.0
        %616 = vmatpush1.msra.mxu0 0.0
        %617 = vmatprep.subr.mxu0 0.0
        %618 = vmatpush1.msra.mxu0 0.0
        %619 = vmatprep.subr.mxu0 0.0
        %620 = vmatpush1.msra.mxu0 0.0
        %621 = vmatprep.subr.mxu0 0.0
        %622 = vmatpush1.msra.mxu0 0.0
        %623 = vmatprep.subr.mxu0 0.0
        %624 = vmatpush1.msra.mxu0 0.0
        %625 = vmatprep.subr.mxu0 0.0
        %626 = vmatpush1.msra.mxu0 0.0
        %627 = vmatprep.subr.mxu0 0.0
        %628 = vmatpush1.msra.mxu0 0.0
        %629 = vmatprep.subr.mxu0 0.0
        %630 = vmatpush1.msra.mxu0 0.0
        %631 = vmatprep.subr.mxu0 0.0
        %632 = vmatpush1.msra.mxu0 0.0
        %633 = vmatprep.subr.mxu0 0.0
        %634 = vmatpush1.msra.mxu0 0.0
        %635 = vmatprep.subr.mxu0 0.0
        %636 = vmatpush1.msra.mxu0 %v599
        %637 = vmatprep.subr.mxu0 0.0
        %638 = vmatpush1.msra.mxu0 %v598
        %639 = vmatprep.subr.mxu0 0.0
        %640 = vmatpush1.msra.mxu0 %v597
        %641 = vmatprep.subr.mxu0 0.0
        %642 = vmatpush1.msra.mxu0 %v596
        %643 = vmatprep.subr.mxu0 0.0
        %644 = vmatpush2.msra.mxu0 0.0
        %645 = vmatprep.subr.mxu0 0.0
        %646 = vmatpush2.msra.mxu0 0.0
        %647 = vmatprep.subr.mxu0 0.0
        %648 = vmatpush2.msra.mxu0 0.0
        %649 = vmatprep.subr.mxu0 0.0
        %650 = vmatpush2.msra.mxu0 0.0
        %651 = vmatprep.subr.mxu0 0.0
        %652 = vmatpush2.msra.mxu0 0.0
        %653 = vmatprep.subr.mxu0 0.0
        %654 = vmatpush2.msra.mxu0 0.0
        %655 = vmatprep.subr.mxu0 0.0
        %656 = vmatpush2.msra.mxu0 0.0
        %657 = vmatprep.subr.mxu0 0.0
        %658 = vmatpush2.msra.mxu0 0.0
        %659 = vmatprep.subr.mxu0 0.0
        %660 = vmatpush2.msra.mxu0 0.0
        %661 = vmatprep.subr.mxu0 0.0
        %662 = vmatpush2.msra.mxu0 0.0
        %663 = vmatprep.subr.mxu0 0.0
        %664 = vmatpush2.msra.mxu0 0.0
        %665 = vmatprep.subr.mxu0 0.0
        %666 = vmatpush2.msra.mxu0 0.0
        %667 = vmatprep.subr.mxu0 0.0
        %668 = vmatpush2.msra.mxu0 0.0
        %669 = vmatprep.subr.mxu0 0.0
        %670 = vmatpush2.msra.mxu0 0.0
        %671 = vmatprep.subr.mxu0 0.0
        %672 = vmatpush2.msra.mxu0 0.0
        %673 = vmatprep.subr.mxu0 0.0
        %674 = vmatpush2.msra.mxu0 0.0
        %675 = vmatprep.mubr.f32.mxu0 0.0
        %676 = vmatmul.mubr.f32.gmra.mxu0 %v609
        %v677 = vpop.f32.mrf.mxu0
        %v678 = vadd.f32 %v605, %v677
        %v679 = vpop.f32.mrf.mxu0
        %680 = vdwg.mxu0
        %v681 = vmul.f32 %v678, 0.35355338
        %v682 = vld [vmem:[#allocation2] sm:$0xff]
        %v683 = vld [vmem:[#allocation3] sm:$0xff]
        %vm684 = vcmask 64512
        %v686 = vsel %vm684, %v681, 0
        %v689 = vsel %vm684, %v682, 0
        %691 = vmatprep.subr.mxu0 0.0
        %692 = vmatpush1.xpose.msra.mxu0 0.0
        %693 = vmatprep.subr.mxu0 0.0
        %694 = vmatpush1.xpose.msra.mxu0 0.0
        %695 = vmatprep.subr.mxu0 0.0
        %696 = vmatpush1.xpose.msra.mxu0 0.0
        %697 = vmatprep.subr.mxu0 0.0
        %698 = vmatpush1.xpose.msra.mxu0 0.0
        %699 = vmatprep.subr.mxu0 0.0
        %700 = vmatpush1.xpose.msra.mxu0 0.0
        %701 = vmatprep.subr.mxu0 0.0
        %702 = vmatpush1.xpose.msra.mxu0 0.0
        %703 = vmatprep.subr.mxu0 0.0
        %704 = vmatpush1.xpose.msra.mxu0 0.0
        %705 = vmatprep.subr.mxu0 0.0
        %706 = vmatpush1.xpose.msra.mxu0 0.0
        %707 = vmatprep.subr.mxu0 0.0
        %708 = vmatpush1.xpose.msra.mxu0 0.0
        %709 = vmatprep.subr.mxu0 0.0
        %710 = vmatpush1.xpose.msra.mxu0 0.0
        %711 = vmatprep.subr.mxu0 0.0
        %712 = vmatpush1.xpose.msra.mxu0 0.0
        %713 = vmatprep.subr.mxu0 0.0
        %714 = vmatpush1.xpose.msra.mxu0 0.0
        %715 = vmatprep.subr.mxu0 0.0
        %716 = vmatpush1.xpose.msra.mxu0 0.0
        %717 = vmatprep.subr.mxu0 0.0
        %718 = vmatpush1.xpose.msra.mxu0 0.0
        %719 = vmatprep.subr.mxu0 0.0
        %720 = vmatpush1.xpose.msra.mxu0 0.0
        %721 = vmatprep.subr.mxu0 0.0
        %722 = vmatpush1.xpose.msra.mxu0 %v689
        %723 = vmatprep.subr.mxu0 0.0
        %724 = vmatpush2.xpose.msra.mxu0 0.0
        %725 = vmatprep.subr.mxu0 0.0
        %726 = vmatpush2.xpose.msra.mxu0 0.0
        %727 = vmatprep.subr.mxu0 0.0
        %728 = vmatpush2.xpose.msra.mxu0 0.0
        %729 = vmatprep.subr.mxu0 0.0
        %730 = vmatpush2.xpose.msra.mxu0 0.0
        %731 = vmatprep.subr.mxu0 0.0
        %732 = vmatpush2.xpose.msra.mxu0 0.0
        %733 = vmatprep.subr.mxu0 0.0
        %734 = vmatpush2.xpose.msra.mxu0 0.0
        %735 = vmatprep.subr.mxu0 0.0
        %736 = vmatpush2.xpose.msra.mxu0 0.0
        %737 = vmatprep.subr.mxu0 0.0
        %738 = vmatpush2.xpose.msra.mxu0 0.0
        %739 = vmatprep.subr.mxu0 0.0
        %740 = vmatpush2.xpose.msra.mxu0 0.0
        %741 = vmatprep.subr.mxu0 0.0
        %742 = vmatpush2.xpose.msra.mxu0 0.0
        %743 = vmatprep.subr.mxu0 0.0
        %744 = vmatpush2.xpose.msra.mxu0 0.0
        %745 = vmatprep.subr.mxu0 0.0
        %746 = vmatpush2.xpose.msra.mxu0 0.0
        %747 = vmatprep.subr.mxu0 0.0
        %748 = vmatpush2.xpose.msra.mxu0 0.0
        %749 = vmatprep.subr.mxu0 0.0
        %750 = vmatpush2.xpose.msra.mxu0 0.0
        %751 = vmatprep.subr.mxu0 0.0
        %752 = vmatpush2.xpose.msra.mxu0 0.0
        %753 = vmatprep.subr.mxu0 0.0
        %754 = vmatpush2.xpose.msra.mxu0 0.0
        %755 = vmatprep.mubr.f32.mxu0 0.0
        %756 = vmatmul.mubr.f32.gmra.mxu0 %v686
        %v757 = vpop.f32.mrf.mxu0
        %v758 = vadd.f32 0.0, %v757
        %v759 = vpop.f32.mrf.mxu0
        %760 = vdwg.mxu0
        %v761 = vsel %vm684, %v758, -inf
        %762 = vmax.xlane.f32.xlu0 %v761
        %v763 = vpop.xlane.xlu0 %762
        %v764 = vsub.f32 %v758, %v763
        %v765 = vmul.f32 %v764, 1.442695
        %v766 = vpow.pop %v765
        %v767 = vsel %vm684, %v766, 0.0
        %768 = vadd.xlane.f32.xlu0 %v767
        %v769 = vpop.xlane.xlu0 %768
        %v770 = vrcp.pop %v769
        %v771 = vmul.f32 %v766, %v770
        %v773 = vsel %vm684, %v771, 0
        %775 = vmatprep.subr.mxu0 0.0
        %776 = vmatpush1.msra.mxu0 0.0
        %777 = vmatprep.subr.mxu0 0.0
        %778 = vmatpush1.msra.mxu0 0.0
        %779 = vmatprep.subr.mxu0 0.0
        %780 = vmatpush1.msra.mxu0 0.0
        %781 = vmatprep.subr.mxu0 0.0
        %782 = vmatpush1.msra.mxu0 0.0
        %783 = vmatprep.subr.mxu0 0.0
        %784 = vmatpush1.msra.mxu0 0.0
        %785 = vmatprep.subr.mxu0 0.0
        %786 = vmatpush1.msra.mxu0 0.0
        %787 = vmatprep.subr.mxu0 0.0
        %788 = vmatpush1.msra.mxu0 0.0
        %789 = vmatprep.subr.mxu0 0.0
        %790 = vmatpush1.msra.mxu0 0.0
        %791 = vmatprep.subr.mxu0 0.0
        %792 = vmatpush1.msra.mxu0 0.0
        %793 = vmatprep.subr.mxu0 0.0
        %794 = vmatpush1.msra.mxu0 0.0
        %795 = vmatprep.subr.mxu0 0.0
        %796 = vmatpush1.msra.mxu0 0.0
        %797 = vmatprep.subr.mxu0 0.0
        %798 = vmatpush1.msra.mxu0 0.0
        %799 = vmatprep.subr.mxu0 0.0
        %800 = vmatpush1.msra.mxu0 0.0
        %801 = vmatprep.subr.mxu0 0.0
        %802 = vmatpush1.msra.mxu0 0.0
        %803 = vmatprep.subr.mxu0 0.0
        %804 = vmatpush1.msra.mxu0 0.0
        %805 = vmatprep.subr.mxu0 0.0
        %806 = vmatpush1.msra.mxu0 %v683
        %807 = vmatprep.subr.mxu0 0.0
        %808 = vmatpush2.msra.mxu0 0.0
        %809 = vmatprep.subr.mxu0 0.0
        %810 = vmatpush2.msra.mxu0 0.0
        %811 = vmatprep.subr.mxu0 0.0
        %812 = vmatpush2.msra.mxu0 0.0
        %813 = vmatprep.subr.mxu0 0.0
        %814 = vmatpush2.msra.mxu0 0.0
        %815 = vmatprep.subr.mxu0 0.0
        %816 = vmatpush2.msra.mxu0 0.0
        %817 = vmatprep.subr.mxu0 0.0
        %818 = vmatpush2.msra.mxu0 0.0
        %819 = vmatprep.subr.mxu0 0.0
        %820 = vmatpush2.msra.mxu0 0.0
        %821 = vmatprep.subr.mxu0 0.0
        %822 = vmatpush2.msra.mxu0 0.0
        %823 = vmatprep.subr.mxu0 0.0
        %824 = vmatpush2.msra.mxu0 0.0
        %825 = vmatprep.subr.mxu0 0.0
        %826 = vmatpush2.msra.mxu0 0.0
        %827 = vmatprep.subr.mxu0 0.0
        %828 = vmatpush2.msra.mxu0 0.0
        %829 = vmatprep.subr.mxu0 0.0
        %830 = vmatpush2.msra.mxu0 0.0
        %831 = vmatprep.subr.mxu0 0.0
        %832 = vmatpush2.msra.mxu0 0.0
        %833 = vmatprep.subr.mxu0 0.0
        %834 = vmatpush2.msra.mxu0 0.0
        %835 = vmatprep.subr.mxu0 0.0
        %836 = vmatpush2.msra.mxu0 0.0
        %837 = vmatprep.subr.mxu0 0.0
        %838 = vmatpush2.msra.mxu0 0.0
        %839 = vmatprep.mubr.f32.mxu0 0.0
        %840 = vmatmul.mubr.f32.gmra.mxu0 %v773
        %v841 = vpop.f32.mrf.mxu0
        %v842 = vadd.f32 0.0, %v841
        %v843 = vpop.f32.mrf.mxu0
        %844 = vdwg.mxu0
        %v845 = vld [vmem:[#allocation12] sm:$0xff]
        %846 = vrot.lane.b32.xlu0 %v681, 120
        %v847 = vpop.permute.xlu0 %846
        %848 = vrot.lane.b32.xlu0 %v682, 120
        %v849 = vpop.permute.xlu0 %848
        %v850 = vsel %vm684, %v847, 0
        %v852 = vsel %vm684, %v849, 0
        %854 = vmatprep.subr.mxu0 0.0
        %855 = vmatpush1.xpose.msra.mxu0 0.0
        %856 = vmatprep.subr.mxu0 0.0
        %857 = vmatpush1.xpose.msra.mxu0 0.0
        %858 = vmatprep.subr.mxu0 0.0
        %859 = vmatpush1.xpose.msra.mxu0 0.0
        %860 = vmatprep.subr.mxu0 0.0
        %861 = vmatpush1.xpose.msra.mxu0 0.0
        %862 = vmatprep.subr.mxu0 0.0
        %863 = vmatpush1.xpose.msra.mxu0 0.0
        %864 = vmatprep.subr.mxu0 0.0
        %865 = vmatpush1.xpose.msra.mxu0 0.0
        %866 = vmatprep.subr.mxu0 0.0
        %867 = vmatpush1.xpose.msra.mxu0 0.0
        %868 = vmatprep.subr.mxu0 0.0
        %869 = vmatpush1.xpose.msra.mxu0 0.0
        %870 = vmatprep.subr.mxu0 0.0
        %871 = vmatpush1.xpose.msra.mxu0 0.0
        %872 = vmatprep.subr.mxu0 0.0
        %873 = vmatpush1.xpose.msra.mxu0 0.0
        %874 = vmatprep.subr.mxu0 0.0
        %875 = vmatpush1.xpose.msra.mxu0 0.0
        %876 = vmatprep.subr.mxu0 0.0
        %877 = vmatpush1.xpose.msra.mxu0 0.0
        %878 = vmatprep.subr.mxu0 0.0
        %879 = vmatpush1.xpose.msra.mxu0 0.0
        %880 = vmatprep.subr.mxu0 0.0
        %881 = vmatpush1.xpose.msra.mxu0 0.0
        %882 = vmatprep.subr.mxu0 0.0
        %883 = vmatpush1.xpose.msra.mxu0 0.0
        %884 = vmatprep.subr.mxu0 0.0
        %885 = vmatpush1.xpose.msra.mxu0 %v852
        %886 = vmatprep.subr.mxu0 0.0
        %887 = vmatpush2.xpose.msra.mxu0 0.0
        %888 = vmatprep.subr.mxu0 0.0
        %889 = vmatpush2.xpose.msra.mxu0 0.0
        %890 = vmatprep.subr.mxu0 0.0
        %891 = vmatpush2.xpose.msra.mxu0 0.0
        %892 = vmatprep.subr.mxu0 0.0
        %893 = vmatpush2.xpose.msra.mxu0 0.0
        %894 = vmatprep.subr.mxu0 0.0
        %895 = vmatpush2.xpose.msra.mxu0 0.0
        %896 = vmatprep.subr.mxu0 0.0
        %897 = vmatpush2.xpose.msra.mxu0 0.0
        %898 = vmatprep.subr.mxu0 0.0
        %899 = vmatpush2.xpose.msra.mxu0 0.0
        %900 = vmatprep.subr.mxu0 0.0
        %901 = vmatpush2.xpose.msra.mxu0 0.0
        %902 = vmatprep.subr.mxu0 0.0
        %903 = vmatpush2.xpose.msra.mxu0 0.0
        %904 = vmatprep.subr.mxu0 0.0
        %905 = vmatpush2.xpose.msra.mxu0 0.0
        %906 = vmatprep.subr.mxu0 0.0
        %907 = vmatpush2.xpose.msra.mxu0 0.0
        %908 = vmatprep.subr.mxu0 0.0
        %909 = vmatpush2.xpose.msra.mxu0 0.0
        %910 = vmatprep.subr.mxu0 0.0
        %911 = vmatpush2.xpose.msra.mxu0 0.0
        %912 = vmatprep.subr.mxu0 0.0
        %913 = vmatpush2.xpose.msra.mxu0 0.0
        %914 = vmatprep.subr.mxu0 0.0
        %915 = vmatpush2.xpose.msra.mxu0 0.0
        %916 = vmatprep.subr.mxu0 0.0
        %917 = vmatpush2.xpose.msra.mxu0 0.0
        %918 = vmatprep.mubr.f32.mxu0 0.0
        %919 = vmatmul.mubr.f32.gmra.mxu0 %v850
        %v920 = vpop.f32.mrf.mxu0
        %v921 = vadd.f32 0.0, %v920
        %v922 = vpop.f32.mrf.mxu0
        %923 = vdwg.mxu0
        %v924 = vsel %vm684, %v921, -inf
        %925 = vmax.xlane.f32.xlu0 %v924
        %v926 = vpop.xlane.xlu0 %925
        %v927 = vsub.f32 %v921, %v926
        %v928 = vmul.f32 %v927, 1.442695
        %v929 = vpow.pop %v928
        %v930 = vsel %vm684, %v929, 0.0
        %931 = vadd.xlane.f32.xlu0 %v930
        %v932 = vpop.xlane.xlu0 %931
        %v933 = vrcp.pop %v932
        %v934 = vmul.f32 %v929, %v933
        %936 = vrot.lane.b32.xlu0 %v683, 120
        %v937 = vpop.permute.xlu0 %936
        %v940 = vsel %vm684, %v934, 0
        %942 = vmatprep.subr.mxu0 0.0
        %943 = vmatpush1.msra.mxu0 0.0
        %944 = vmatprep.subr.mxu0 0.0
        %945 = vmatpush1.msra.mxu0 0.0
        %946 = vmatprep.subr.mxu0 0.0
        %947 = vmatpush1.msra.mxu0 0.0
        %948 = vmatprep.subr.mxu0 0.0
        %949 = vmatpush1.msra.mxu0 0.0
        %950 = vmatprep.subr.mxu0 0.0
        %951 = vmatpush1.msra.mxu0 0.0
        %952 = vmatprep.subr.mxu0 0.0
        %953 = vmatpush1.msra.mxu0 0.0
        %954 = vmatprep.subr.mxu0 0.0
        %955 = vmatpush1.msra.mxu0 0.0
        %956 = vmatprep.subr.mxu0 0.0
        %957 = vmatpush1.msra.mxu0 0.0
        %958 = vmatprep.subr.mxu0 0.0
        %959 = vmatpush1.msra.mxu0 0.0
        %960 = vmatprep.subr.mxu0 0.0
        %961 = vmatpush1.msra.mxu0 0.0
        %962 = vmatprep.subr.mxu0 0.0
        %963 = vmatpush1.msra.mxu0 0.0
        %964 = vmatprep.subr.mxu0 0.0
        %965 = vmatpush1.msra.mxu0 0.0
        %966 = vmatprep.subr.mxu0 0.0
        %967 = vmatpush1.msra.mxu0 0.0
        %968 = vmatprep.subr.mxu0 0.0
        %969 = vmatpush1.msra.mxu0 0.0
        %970 = vmatprep.subr.mxu0 0.0
        %971 = vmatpush1.msra.mxu0 0.0
        %972 = vmatprep.subr.mxu0 0.0
        %973 = vmatpush1.msra.mxu0 %v937
        %974 = vmatprep.subr.mxu0 0.0
        %975 = vmatpush2.msra.mxu0 0.0
        %976 = vmatprep.subr.mxu0 0.0
        %977 = vmatpush2.msra.mxu0 0.0
        %978 = vmatprep.subr.mxu0 0.0
        %979 = vmatpush2.msra.mxu0 0.0
        %980 = vmatprep.subr.mxu0 0.0
        %981 = vmatpush2.msra.mxu0 0.0
        %982 = vmatprep.subr.mxu0 0.0
        %983 = vmatpush2.msra.mxu0 0.0
        %984 = vmatprep.subr.mxu0 0.0
        %985 = vmatpush2.msra.mxu0 0.0
        %986 = vmatprep.subr.mxu0 0.0
        %987 = vmatpush2.msra.mxu0 0.0
        %988 = vmatprep.subr.mxu0 0.0
        %989 = vmatpush2.msra.mxu0 0.0
        %990 = vmatprep.subr.mxu0 0.0
        %991 = vmatpush2.msra.mxu0 0.0
        %992 = vmatprep.subr.mxu0 0.0
        %993 = vmatpush2.msra.mxu0 0.0
        %994 = vmatprep.subr.mxu0 0.0
        %995 = vmatpush2.msra.mxu0 0.0
        %996 = vmatprep.subr.mxu0 0.0
        %997 = vmatpush2.msra.mxu0 0.0
        %998 = vmatprep.subr.mxu0 0.0
        %999 = vmatpush2.msra.mxu0 0.0
        %1000 = vmatprep.subr.mxu0 0.0
        %1001 = vmatpush2.msra.mxu0 0.0
        %1002 = vmatprep.subr.mxu0 0.0
        %1003 = vmatpush2.msra.mxu0 0.0
        %1004 = vmatprep.subr.mxu0 0.0
        %1005 = vmatpush2.msra.mxu0 0.0
        %1006 = vmatprep.mubr.f32.mxu0 0.0
        %1007 = vmatmul.mubr.f32.gmra.mxu0 %v940
        %v1008 = vpop.f32.mrf.mxu0
        %v1009 = vadd.f32 0.0, %v1008
        %v1010 = vpop.f32.mrf.mxu0
        %1011 = vdwg.mxu0
        %v1012 = vld [vmem:[#allocation12 + $0x8] sm:$0xff]
        %v1014 = vsel %vm684, %v1009, 0
        %1016 = vmatprep.subr.mxu0 0.0
        %1017 = vmatpush1.msra.mxu0 0.0
        %1018 = vmatprep.subr.mxu0 0.0
        %1019 = vmatpush1.msra.mxu0 0.0
        %1020 = vmatprep.subr.mxu0 0.0
        %1021 = vmatpush1.msra.mxu0 0.0
        %1022 = vmatprep.subr.mxu0 0.0
        %1023 = vmatpush1.msra.mxu0 0.0
        %1024 = vmatprep.subr.mxu0 0.0
        %1025 = vmatpush1.msra.mxu0 0.0
        %1026 = vmatprep.subr.mxu0 0.0
        %1027 = vmatpush1.msra.mxu0 0.0
        %1028 = vmatprep.subr.mxu0 0.0
        %1029 = vmatpush1.msra.mxu0 0.0
        %1030 = vmatprep.subr.mxu0 0.0
        %1031 = vmatpush1.msra.mxu0 0.0
        %1032 = vmatprep.subr.mxu0 0.0
        %1033 = vmatpush1.msra.mxu0 0.0
        %1034 = vmatprep.subr.mxu0 0.0
        %1035 = vmatpush1.msra.mxu0 0.0
        %1036 = vmatprep.subr.mxu0 0.0
        %1037 = vmatpush1.msra.mxu0 0.0
        %1038 = vmatprep.subr.mxu0 0.0
        %1039 = vmatpush1.msra.mxu0 0.0
        %1040 = vmatprep.subr.mxu0 0.0
        %1041 = vmatpush1.msra.mxu0 0.0
        %1042 = vmatprep.subr.mxu0 0.0
        %1043 = vmatpush1.msra.mxu0 0.0
        %1044 = vmatprep.subr.mxu0 0.0
        %1045 = vmatpush1.msra.mxu0 0.0
        %1046 = vmatprep.subr.mxu0 0.0
        %1047 = vmatpush1.msra.mxu0 %v1012
        %1048 = vmatprep.subr.mxu0 0.0
        %1049 = vmatpush2.msra.mxu0 0.0
        %1050 = vmatprep.subr.mxu0 0.0
        %1051 = vmatpush2.msra.mxu0 0.0
        %1052 = vmatprep.subr.mxu0 0.0
        %1053 = vmatpush2.msra.mxu0 0.0
        %1054 = vmatprep.subr.mxu0 0.0
        %1055 = vmatpush2.msra.mxu0 0.0
        %1056 = vmatprep.subr.mxu0 0.0
        %1057 = vmatpush2.msra.mxu0 0.0
        %1058 = vmatprep.subr.mxu0 0.0
        %1059 = vmatpush2.msra.mxu0 0.0
        %1060 = vmatprep.subr.mxu0 0.0
        %1061 = vmatpush2.msra.mxu0 0.0
        %1062 = vmatprep.subr.mxu0 0.0
        %1063 = vmatpush2.msra.mxu0 0.0
        %1064 = vmatprep.subr.mxu0 0.0
        %1065 = vmatpush2.msra.mxu0 0.0
        %1066 = vmatprep.subr.mxu0 0.0
        %1067 = vmatpush2.msra.mxu0 0.0
        %1068 = vmatprep.subr.mxu0 0.0
        %1069 = vmatpush2.msra.mxu0 0.0
        %1070 = vmatprep.subr.mxu0 0.0
        %1071 = vmatpush2.msra.mxu0 0.0
        %1072 = vmatprep.subr.mxu0 0.0
        %1073 = vmatpush2.msra.mxu0 0.0
        %1074 = vmatprep.subr.mxu0 0.0
        %1075 = vmatpush2.msra.mxu0 0.0
        %1076 = vmatprep.subr.mxu0 0.0
        %1077 = vmatpush2.msra.mxu0 0.0
        %1078 = vmatprep.subr.mxu0 0.0
        %1079 = vmatpush2.msra.mxu0 0.0
        %1080 = vmatprep.mubr.f32.mxu0 0.0
        %1081 = vmatmul.mubr.f32.gmra.mxu0 %v1014
        %v1082 = vpop.f32.mrf.mxu0
        %v1083 = vadd.f32 0.0, %v1082
        %v1084 = vpop.f32.mrf.mxu0
        %1085 = vdwg.mxu0
        %v1087 = vsel %vm684, %v842, 0
        %1089 = vmatprep.subr.mxu0 0.0
        %1090 = vmatpush1.msra.mxu0 0.0
        %1091 = vmatprep.subr.mxu0 0.0
        %1092 = vmatpush1.msra.mxu0 0.0
        %1093 = vmatprep.subr.mxu0 0.0
        %1094 = vmatpush1.msra.mxu0 0.0
        %1095 = vmatprep.subr.mxu0 0.0
        %1096 = vmatpush1.msra.mxu0 0.0
        %1097 = vmatprep.subr.mxu0 0.0
        %1098 = vmatpush1.msra.mxu0 0.0
        %1099 = vmatprep.subr.mxu0 0.0
        %1100 = vmatpush1.msra.mxu0 0.0
        %1101 = vmatprep.subr.mxu0 0.0
        %1102 = vmatpush1.msra.mxu0 0.0
        %1103 = vmatprep.subr.mxu0 0.0
        %1104 = vmatpush1.msra.mxu0 0.0
        %1105 = vmatprep.subr.mxu0 0.0
        %1106 = vmatpush1.msra.mxu0 0.0
        %1107 = vmatprep.subr.mxu0 0.0
        %1108 = vmatpush1.msra.mxu0 0.0
        %1109 = vmatprep.subr.mxu0 0.0
        %1110 = vmatpush1.msra.mxu0 0.0
        %1111 = vmatprep.subr.mxu0 0.0
        %1112 = vmatpush1.msra.mxu0 0.0
        %1113 = vmatprep.subr.mxu0 0.0
        %1114 = vmatpush1.msra.mxu0 0.0
        %1115 = vmatprep.subr.mxu0 0.0
        %1116 = vmatpush1.msra.mxu0 0.0
        %1117 = vmatprep.subr.mxu0 0.0
        %1118 = vmatpush1.msra.mxu0 0.0
        %1119 = vmatprep.subr.mxu0 0.0
        %1120 = vmatpush1.msra.mxu0 %v845
        %1121 = vmatprep.subr.mxu0 0.0
        %1122 = vmatpush2.msra.mxu0 0.0
        %1123 = vmatprep.subr.mxu0 0.0
        %1124 = vmatpush2.msra.mxu0 0.0
        %1125 = vmatprep.subr.mxu0 0.0
        %1126 = vmatpush2.msra.mxu0 0.0
        %1127 = vmatprep.subr.mxu0 0.0
        %1128 = vmatpush2.msra.mxu0 0.0
        %1129 = vmatprep.subr.mxu0 0.0
        %1130 = vmatpush2.msra.mxu0 0.0
        %1131 = vmatprep.subr.mxu0 0.0
        %1132 = vmatpush2.msra.mxu0 0.0
        %1133 = vmatprep.subr.mxu0 0.0
        %1134 = vmatpush2.msra.mxu0 0.0
        %1135 = vmatprep.subr.mxu0 0.0
        %1136 = vmatpush2.msra.mxu0 0.0
        %1137 = vmatprep.subr.mxu0 0.0
        %1138 = vmatpush2.msra.mxu0 0.0
        %1139 = vmatprep.subr.mxu0 0.0
        %1140 = vmatpush2.msra.mxu0 0.0
        %1141 = vmatprep.subr.mxu0 0.0
        %1142 = vmatpush2.msra.mxu0 0.0
        %1143 = vmatprep.subr.mxu0 0.0
        %1144 = vmatpush2.msra.mxu0 0.0
        %1145 = vmatprep.subr.mxu0 0.0
        %1146 = vmatpush2.msra.mxu0 0.0
        %1147 = vmatprep.subr.mxu0 0.0
        %1148 = vmatpush2.msra.mxu0 0.0
        %1149 = vmatprep.subr.mxu0 0.0
        %1150 = vmatpush2.msra.mxu0 0.0
        %1151 = vmatprep.subr.mxu0 0.0
        %1152 = vmatpush2.msra.mxu0 0.0
        %1153 = vmatprep.mubr.f32.mxu0 0.0
        %1154 = vmatmul.mubr.f32.gmra.mxu0 %v1087
        %v1155 = vpop.f32.mrf.mxu0
        %v1156 = vadd.f32 %v1083, %v1155
        %v1157 = vpop.f32.mrf.mxu0
        %1158 = vdwg.mxu0
        %1159 = vrot.lane.b32.xlu0 %v681, 112
        %v1160 = vpop.permute.xlu0 %1159
        %1161 = vrot.lane.b32.xlu0 %v682, 112
        %v1162 = vpop.permute.xlu0 %1161
        %v1163 = vsel %vm684, %v1160, 0
        %v1165 = vsel %vm684, %v1162, 0
        %1167 = vmatprep.subr.mxu0 0.0
        %1168 = vmatpush1.xpose.msra.mxu0 0.0
        %1169 = vmatprep.subr.mxu0 0.0
        %1170 = vmatpush1.xpose.msra.mxu0 0.0
        %1171 = vmatprep.subr.mxu0 0.0
        %1172 = vmatpush1.xpose.msra.mxu0 0.0
        %1173 = vmatprep.subr.mxu0 0.0
        %1174 = vmatpush1.xpose.msra.mxu0 0.0
        %1175 = vmatprep.subr.mxu0 0.0
        %1176 = vmatpush1.xpose.msra.mxu0 0.0
        %1177 = vmatprep.subr.mxu0 0.0
        %1178 = vmatpush1.xpose.msra.mxu0 0.0
        %1179 = vmatprep.subr.mxu0 0.0
        %1180 = vmatpush1.xpose.msra.mxu0 0.0
        %1181 = vmatprep.subr.mxu0 0.0
        %1182 = vmatpush1.xpose.msra.mxu0 0.0
        %1183 = vmatprep.subr.mxu0 0.0
        %1184 = vmatpush1.xpose.msra.mxu0 0.0
        %1185 = vmatprep.subr.mxu0 0.0
        %1186 = vmatpush1.xpose.msra.mxu0 0.0
        %1187 = vmatprep.subr.mxu0 0.0
        %1188 = vmatpush1.xpose.msra.mxu0 0.0
        %1189 = vmatprep.subr.mxu0 0.0
        %1190 = vmatpush1.xpose.msra.mxu0 0.0
        %1191 = vmatprep.subr.mxu0 0.0
        %1192 = vmatpush1.xpose.msra.mxu0 0.0
        %1193 = vmatprep.subr.mxu0 0.0
        %1194 = vmatpush1.xpose.msra.mxu0 0.0
        %1195 = vmatprep.subr.mxu0 0.0
        %1196 = vmatpush1.xpose.msra.mxu0 0.0
        %1197 = vmatprep.subr.mxu0 0.0
        %1198 = vmatpush1.xpose.msra.mxu0 %v1165
        %1199 = vmatprep.subr.mxu0 0.0
        %1200 = vmatpush2.xpose.msra.mxu0 0.0
        %1201 = vmatprep.subr.mxu0 0.0
        %1202 = vmatpush2.xpose.msra.mxu0 0.0
        %1203 = vmatprep.subr.mxu0 0.0
        %1204 = vmatpush2.xpose.msra.mxu0 0.0
        %1205 = vmatprep.subr.mxu0 0.0
        %1206 = vmatpush2.xpose.msra.mxu0 0.0
        %1207 = vmatprep.subr.mxu0 0.0
        %1208 = vmatpush2.xpose.msra.mxu0 0.0
        %1209 = vmatprep.subr.mxu0 0.0
        %1210 = vmatpush2.xpose.msra.mxu0 0.0
        %1211 = vmatprep.subr.mxu0 0.0
        %1212 = vmatpush2.xpose.msra.mxu0 0.0
        %1213 = vmatprep.subr.mxu0 0.0
        %1214 = vmatpush2.xpose.msra.mxu0 0.0
        %1215 = vmatprep.subr.mxu0 0.0
        %1216 = vmatpush2.xpose.msra.mxu0 0.0
        %1217 = vmatprep.subr.mxu0 0.0
        %1218 = vmatpush2.xpose.msra.mxu0 0.0
        %1219 = vmatprep.subr.mxu0 0.0
        %1220 = vmatpush2.xpose.msra.mxu0 0.0
        %1221 = vmatprep.subr.mxu0 0.0
        %1222 = vmatpush2.xpose.msra.mxu0 0.0
        %1223 = vmatprep.subr.mxu0 0.0
        %1224 = vmatpush2.xpose.msra.mxu0 0.0
        %1225 = vmatprep.subr.mxu0 0.0
        %1226 = vmatpush2.xpose.msra.mxu0 0.0
        %1227 = vmatprep.subr.mxu0 0.0
        %1228 = vmatpush2.xpose.msra.mxu0 0.0
        %1229 = vmatprep.subr.mxu0 0.0
        %1230 = vmatpush2.xpose.msra.mxu0 0.0
        %1231 = vmatprep.mubr.f32.mxu0 0.0
        %1232 = vmatmul.mubr.f32.gmra.mxu0 %v1163
        %v1233 = vpop.f32.mrf.mxu0
        %v1234 = vadd.f32 0.0, %v1233
        %v1235 = vpop.f32.mrf.mxu0
        %1236 = vdwg.mxu0
        %v1237 = vsel %vm684, %v1234, -inf
        %1238 = vmax.xlane.f32.xlu0 %v1237
        %v1239 = vpop.xlane.xlu0 %1238
        %v1240 = vsub.f32 %v1234, %v1239
        %v1241 = vmul.f32 %v1240, 1.442695
        %v1242 = vpow.pop %v1241
        %v1243 = vsel %vm684, %v1242, 0.0
        %1244 = vadd.xlane.f32.xlu0 %v1243
        %v1245 = vpop.xlane.xlu0 %1244
        %v1246 = vrcp.pop %v1245
        %v1247 = vmul.f32 %v1242, %v1246
        %1248 = vrot.lane.b32.xlu0 %v683, 112
        %v1249 = vpop.permute.xlu0 %1248
        %v1252 = vsel %vm684, %v1247, 0
        %1254 = vmatprep.subr.mxu0 0.0
        %1255 = vmatpush1.msra.mxu0 0.0
        %1256 = vmatprep.subr.mxu0 0.0
        %1257 = vmatpush1.msra.mxu0 0.0
        %1258 = vmatprep.subr.mxu0 0.0
        %1259 = vmatpush1.msra.mxu0 0.0
        %1260 = vmatprep.subr.mxu0 0.0
        %1261 = vmatpush1.msra.mxu0 0.0
        %1262 = vmatprep.subr.mxu0 0.0
        %1263 = vmatpush1.msra.mxu0 0.0
        %1264 = vmatprep.subr.mxu0 0.0
        %1265 = vmatpush1.msra.mxu0 0.0
        %1266 = vmatprep.subr.mxu0 0.0
        %1267 = vmatpush1.msra.mxu0 0.0
        %1268 = vmatprep.subr.mxu0 0.0
        %1269 = vmatpush1.msra.mxu0 0.0
        %1270 = vmatprep.subr.mxu0 0.0
        %1271 = vmatpush1.msra.mxu0 0.0
        %1272 = vmatprep.subr.mxu0 0.0
        %1273 = vmatpush1.msra.mxu0 0.0
        %1274 = vmatprep.subr.mxu0 0.0
        %1275 = vmatpush1.msra.mxu0 0.0
        %1276 = vmatprep.subr.mxu0 0.0
        %1277 = vmatpush1.msra.mxu0 0.0
        %1278 = vmatprep.subr.mxu0 0.0
        %1279 = vmatpush1.msra.mxu0 0.0
        %1280 = vmatprep.subr.mxu0 0.0
        %1281 = vmatpush1.msra.mxu0 0.0
        %1282 = vmatprep.subr.mxu0 0.0
        %1283 = vmatpush1.msra.mxu0 0.0
        %1284 = vmatprep.subr.mxu0 0.0
        %1285 = vmatpush1.msra.mxu0 %v1249
        %1286 = vmatprep.subr.mxu0 0.0
        %1287 = vmatpush2.msra.mxu0 0.0
        %1288 = vmatprep.subr.mxu0 0.0
        %1289 = vmatpush2.msra.mxu0 0.0
        %1290 = vmatprep.subr.mxu0 0.0
        %1291 = vmatpush2.msra.mxu0 0.0
        %1292 = vmatprep.subr.mxu0 0.0
        %1293 = vmatpush2.msra.mxu0 0.0
        %1294 = vmatprep.subr.mxu0 0.0
        %1295 = vmatpush2.msra.mxu0 0.0
        %1296 = vmatprep.subr.mxu0 0.0
        %1297 = vmatpush2.msra.mxu0 0.0
        %1298 = vmatprep.subr.mxu0 0.0
        %1299 = vmatpush2.msra.mxu0 0.0
        %1300 = vmatprep.subr.mxu0 0.0
        %1301 = vmatpush2.msra.mxu0 0.0
        %1302 = vmatprep.subr.mxu0 0.0
        %1303 = vmatpush2.msra.mxu0 0.0
        %1304 = vmatprep.subr.mxu0 0.0
        %1305 = vmatpush2.msra.mxu0 0.0
        %1306 = vmatprep.subr.mxu0 0.0
        %1307 = vmatpush2.msra.mxu0 0.0
        %1308 = vmatprep.subr.mxu0 0.0
        %1309 = vmatpush2.msra.mxu0 0.0
        %1310 = vmatprep.subr.mxu0 0.0
        %1311 = vmatpush2.msra.mxu0 0.0
        %1312 = vmatprep.subr.mxu0 0.0
        %1313 = vmatpush2.msra.mxu0 0.0
        %1314 = vmatprep.subr.mxu0 0.0
        %1315 = vmatpush2.msra.mxu0 0.0
        %1316 = vmatprep.subr.mxu0 0.0
        %1317 = vmatpush2.msra.mxu0 0.0
        %1318 = vmatprep.mubr.f32.mxu0 0.0
        %1319 = vmatmul.mubr.f32.gmra.mxu0 %v1252
        %v1320 = vpop.f32.mrf.mxu0
        %v1321 = vadd.f32 0.0, %v1320
        %v1322 = vpop.f32.mrf.mxu0
        %1323 = vdwg.mxu0
        %v1324 = vld [vmem:[#allocation12 + $0x10] sm:$0xff]
        %v1326 = vsel %vm684, %v1321, 0
        %1328 = vmatprep.subr.mxu0 0.0
        %1329 = vmatpush1.msra.mxu0 0.0
        %1330 = vmatprep.subr.mxu0 0.0
        %1331 = vmatpush1.msra.mxu0 0.0
        %1332 = vmatprep.subr.mxu0 0.0
        %1333 = vmatpush1.msra.mxu0 0.0
        %1334 = vmatprep.subr.mxu0 0.0
        %1335 = vmatpush1.msra.mxu0 0.0
        %1336 = vmatprep.subr.mxu0 0.0
        %1337 = vmatpush1.msra.mxu0 0.0
        %1338 = vmatprep.subr.mxu0 0.0
        %1339 = vmatpush1.msra.mxu0 0.0
        %1340 = vmatprep.subr.mxu0 0.0
        %1341 = vmatpush1.msra.mxu0 0.0
        %1342 = vmatprep.subr.mxu0 0.0
        %1343 = vmatpush1.msra.mxu0 0.0
        %1344 = vmatprep.subr.mxu0 0.0
        %1345 = vmatpush1.msra.mxu0 0.0
        %1346 = vmatprep.subr.mxu0 0.0
        %1347 = vmatpush1.msra.mxu0 0.0
        %1348 = vmatprep.subr.mxu0 0.0
        %1349 = vmatpush1.msra.mxu0 0.0
        %1350 = vmatprep.subr.mxu0 0.0
        %1351 = vmatpush1.msra.mxu0 0.0
        %1352 = vmatprep.subr.mxu0 0.0
        %1353 = vmatpush1.msra.mxu0 0.0
        %1354 = vmatprep.subr.mxu0 0.0
        %1355 = vmatpush1.msra.mxu0 0.0
        %1356 = vmatprep.subr.mxu0 0.0
        %1357 = vmatpush1.msra.mxu0 0.0
        %1358 = vmatprep.subr.mxu0 0.0
        %1359 = vmatpush1.msra.mxu0 %v1324
        %1360 = vmatprep.subr.mxu0 0.0
        %1361 = vmatpush2.msra.mxu0 0.0
        %1362 = vmatprep.subr.mxu0 0.0
        %1363 = vmatpush2.msra.mxu0 0.0
        %1364 = vmatprep.subr.mxu0 0.0
        %1365 = vmatpush2.msra.mxu0 0.0
        %1366 = vmatprep.subr.mxu0 0.0
        %1367 = vmatpush2.msra.mxu0 0.0
        %1368 = vmatprep.subr.mxu0 0.0
        %1369 = vmatpush2.msra.mxu0 0.0
        %1370 = vmatprep.subr.mxu0 0.0
        %1371 = vmatpush2.msra.mxu0 0.0
        %1372 = vmatprep.subr.mxu0 0.0
        %1373 = vmatpush2.msra.mxu0 0.0
        %1374 = vmatprep.subr.mxu0 0.0
        %1375 = vmatpush2.msra.mxu0 0.0
        %1376 = vmatprep.subr.mxu0 0.0
        %1377 = vmatpush2.msra.mxu0 0.0
        %1378 = vmatprep.subr.mxu0 0.0
        %1379 = vmatpush2.msra.mxu0 0.0
        %1380 = vmatprep.subr.mxu0 0.0
        %1381 = vmatpush2.msra.mxu0 0.0
        %1382 = vmatprep.subr.mxu0 0.0
        %1383 = vmatpush2.msra.mxu0 0.0
        %1384 = vmatprep.subr.mxu0 0.0
        %1385 = vmatpush2.msra.mxu0 0.0
        %1386 = vmatprep.subr.mxu0 0.0
        %1387 = vmatpush2.msra.mxu0 0.0
        %1388 = vmatprep.subr.mxu0 0.0
        %1389 = vmatpush2.msra.mxu0 0.0
        %1390 = vmatprep.subr.mxu0 0.0
        %1391 = vmatpush2.msra.mxu0 0.0
        %1392 = vmatprep.mubr.f32.mxu0 0.0
        %1393 = vmatmul.mubr.f32.gmra.mxu0 %v1326
        %v1394 = vpop.f32.mrf.mxu0
        %v1395 = vadd.f32 0.0, %v1394
        %v1396 = vpop.f32.mrf.mxu0
        %1397 = vdwg.mxu0
        %v1398 = vadd.f32 %v1156, %v1395
        %1399 = vrot.lane.b32.xlu0 %v681, 104
        %v1400 = vpop.permute.xlu0 %1399
        %1401 = vrot.lane.b32.xlu0 %v682, 104
        %v1402 = vpop.permute.xlu0 %1401
        %v1403 = vsel %vm684, %v1400, 0
        %v1405 = vsel %vm684, %v1402, 0
        %1407 = vmatprep.subr.mxu0 0.0
        %1408 = vmatpush1.xpose.msra.mxu0 0.0
        %1409 = vmatprep.subr.mxu0 0.0
        %1410 = vmatpush1.xpose.msra.mxu0 0.0
        %1411 = vmatprep.subr.mxu0 0.0
        %1412 = vmatpush1.xpose.msra.mxu0 0.0
        %1413 = vmatprep.subr.mxu0 0.0
        %1414 = vmatpush1.xpose.msra.mxu0 0.0
        %1415 = vmatprep.subr.mxu0 0.0
        %1416 = vmatpush1.xpose.msra.mxu0 0.0
        %1417 = vmatprep.subr.mxu0 0.0
        %1418 = vmatpush1.xpose.msra.mxu0 0.0
        %1419 = vmatprep.subr.mxu0 0.0
        %1420 = vmatpush1.xpose.msra.mxu0 0.0
        %1421 = vmatprep.subr.mxu0 0.0
        %1422 = vmatpush1.xpose.msra.mxu0 0.0
        %1423 = vmatprep.subr.mxu0 0.0
        %1424 = vmatpush1.xpose.msra.mxu0 0.0
        %1425 = vmatprep.subr.mxu0 0.0
        %1426 = vmatpush1.xpose.msra.mxu0 0.0
        %1427 = vmatprep.subr.mxu0 0.0
        %1428 = vmatpush1.xpose.msra.mxu0 0.0
        %1429 = vmatprep.subr.mxu0 0.0
        %1430 = vmatpush1.xpose.msra.mxu0 0.0
        %1431 = vmatprep.subr.mxu0 0.0
        %1432 = vmatpush1.xpose.msra.mxu0 0.0
        %1433 = vmatprep.subr.mxu0 0.0
        %1434 = vmatpush1.xpose.msra.mxu0 0.0
        %1435 = vmatprep.subr.mxu0 0.0
        %1436 = vmatpush1.xpose.msra.mxu0 0.0
        %1437 = vmatprep.subr.mxu0 0.0
        %1438 = vmatpush1.xpose.msra.mxu0 %v1405
        %1439 = vmatprep.subr.mxu0 0.0
        %1440 = vmatpush2.xpose.msra.mxu0 0.0
        %1441 = vmatprep.subr.mxu0 0.0
        %1442 = vmatpush2.xpose.msra.mxu0 0.0
        %1443 = vmatprep.subr.mxu0 0.0
        %1444 = vmatpush2.xpose.msra.mxu0 0.0
        %1445 = vmatprep.subr.mxu0 0.0
        %1446 = vmatpush2.xpose.msra.mxu0 0.0
        %1447 = vmatprep.subr.mxu0 0.0
        %1448 = vmatpush2.xpose.msra.mxu0 0.0
        %1449 = vmatprep.subr.mxu0 0.0
        %1450 = vmatpush2.xpose.msra.mxu0 0.0
        %1451 = vmatprep.subr.mxu0 0.0
        %1452 = vmatpush2.xpose.msra.mxu0 0.0
        %1453 = vmatprep.subr.mxu0 0.0
        %1454 = vmatpush2.xpose.msra.mxu0 0.0
        %1455 = vmatprep.subr.mxu0 0.0
        %1456 = vmatpush2.xpose.msra.mxu0 0.0
        %1457 = vmatprep.subr.mxu0 0.0
        %1458 = vmatpush2.xpose.msra.mxu0 0.0
        %1459 = vmatprep.subr.mxu0 0.0
        %1460 = vmatpush2.xpose.msra.mxu0 0.0
        %1461 = vmatprep.subr.mxu0 0.0
        %1462 = vmatpush2.xpose.msra.mxu0 0.0
        %1463 = vmatprep.subr.mxu0 0.0
        %1464 = vmatpush2.xpose.msra.mxu0 0.0
        %1465 = vmatprep.subr.mxu0 0.0
        %1466 = vmatpush2.xpose.msra.mxu0 0.0
        %1467 = vmatprep.subr.mxu0 0.0
        %1468 = vmatpush2.xpose.msra.mxu0 0.0
        %1469 = vmatprep.subr.mxu0 0.0
        %1470 = vmatpush2.xpose.msra.mxu0 0.0
        %1471 = vmatprep.mubr.f32.mxu0 0.0
        %1472 = vmatmul.mubr.f32.gmra.mxu0 %v1403
        %v1473 = vpop.f32.mrf.mxu0
        %v1474 = vadd.f32 0.0, %v1473
        %v1475 = vpop.f32.mrf.mxu0
        %1476 = vdwg.mxu0
        %v1477 = vsel %vm684, %v1474, -inf
        %1478 = vmax.xlane.f32.xlu0 %v1477
        %v1479 = vpop.xlane.xlu0 %1478
        %v1480 = vsub.f32 %v1474, %v1479
        %v1481 = vmul.f32 %v1480, 1.442695
        %v1482 = vpow.pop %v1481
        %v1483 = vsel %vm684, %v1482, 0.0
        %1484 = vadd.xlane.f32.xlu0 %v1483
        %v1485 = vpop.xlane.xlu0 %1484
        %v1486 = vrcp.pop %v1485
        %v1487 = vmul.f32 %v1482, %v1486
        %1488 = vrot.lane.b32.xlu0 %v683, 104
        %v1489 = vpop.permute.xlu0 %1488
        %v1492 = vsel %vm684, %v1487, 0
        %1494 = vmatprep.subr.mxu0 0.0
        %1495 = vmatpush1.msra.mxu0 0.0
        %1496 = vmatprep.subr.mxu0 0.0
        %1497 = vmatpush1.msra.mxu0 0.0
        %1498 = vmatprep.subr.mxu0 0.0
        %1499 = vmatpush1.msra.mxu0 0.0
        %1500 = vmatprep.subr.mxu0 0.0
        %1501 = vmatpush1.msra.mxu0 0.0
        %1502 = vmatprep.subr.mxu0 0.0
        %1503 = vmatpush1.msra.mxu0 0.0
        %1504 = vmatprep.subr.mxu0 0.0
        %1505 = vmatpush1.msra.mxu0 0.0
        %1506 = vmatprep.subr.mxu0 0.0
        %1507 = vmatpush1.msra.mxu0 0.0
        %1508 = vmatprep.subr.mxu0 0.0
        %1509 = vmatpush1.msra.mxu0 0.0
        %1510 = vmatprep.subr.mxu0 0.0
        %1511 = vmatpush1.msra.mxu0 0.0
        %1512 = vmatprep.subr.mxu0 0.0
        %1513 = vmatpush1.msra.mxu0 0.0
        %1514 = vmatprep.subr.mxu0 0.0
        %1515 = vmatpush1.msra.mxu0 0.0
        %1516 = vmatprep.subr.mxu0 0.0
        %1517 = vmatpush1.msra.mxu0 0.0
        %1518 = vmatprep.subr.mxu0 0.0
        %1519 = vmatpush1.msra.mxu0 0.0
        %1520 = vmatprep.subr.mxu0 0.0
        %1521 = vmatpush1.msra.mxu0 0.0
        %1522 = vmatprep.subr.mxu0 0.0
        %1523 = vmatpush1.msra.mxu0 0.0
        %1524 = vmatprep.subr.mxu0 0.0
        %1525 = vmatpush1.msra.mxu0 %v1489
        %1526 = vmatprep.subr.mxu0 0.0
        %1527 = vmatpush2.msra.mxu0 0.0
        %1528 = vmatprep.subr.mxu0 0.0
        %1529 = vmatpush2.msra.mxu0 0.0
        %1530 = vmatprep.subr.mxu0 0.0
        %1531 = vmatpush2.msra.mxu0 0.0
        %1532 = vmatprep.subr.mxu0 0.0
        %1533 = vmatpush2.msra.mxu0 0.0
        %1534 = vmatprep.subr.mxu0 0.0
        %1535 = vmatpush2.msra.mxu0 0.0
        %1536 = vmatprep.subr.mxu0 0.0
        %1537 = vmatpush2.msra.mxu0 0.0
        %1538 = vmatprep.subr.mxu0 0.0
        %1539 = vmatpush2.msra.mxu0 0.0
        %1540 = vmatprep.subr.mxu0 0.0
        %1541 = vmatpush2.msra.mxu0 0.0
        %1542 = vmatprep.subr.mxu0 0.0
        %1543 = vmatpush2.msra.mxu0 0.0
        %1544 = vmatprep.subr.mxu0 0.0
        %1545 = vmatpush2.msra.mxu0 0.0
        %1546 = vmatprep.subr.mxu0 0.0
        %1547 = vmatpush2.msra.mxu0 0.0
        %1548 = vmatprep.subr.mxu0 0.0
        %1549 = vmatpush2.msra.mxu0 0.0
        %1550 = vmatprep.subr.mxu0 0.0
        %1551 = vmatpush2.msra.mxu0 0.0
        %1552 = vmatprep.subr.mxu0 0.0
        %1553 = vmatpush2.msra.mxu0 0.0
        %1554 = vmatprep.subr.mxu0 0.0
        %1555 = vmatpush2.msra.mxu0 0.0
        %1556 = vmatprep.subr.mxu0 0.0
        %1557 = vmatpush2.msra.mxu0 0.0
        %1558 = vmatprep.mubr.f32.mxu0 0.0
        %1559 = vmatmul.mubr.f32.gmra.mxu0 %v1492
        %v1560 = vpop.f32.mrf.mxu0
        %v1561 = vadd.f32 0.0, %v1560
        %v1562 = vpop.f32.mrf.mxu0
        %1563 = vdwg.mxu0
        %v1564 = vld [vmem:[#allocation12 + $0x18] sm:$0xff]
        %v1566 = vsel %vm684, %v1561, 0
        %1568 = vmatprep.subr.mxu0 0.0
        %1569 = vmatpush1.msra.mxu0 0.0
        %1570 = vmatprep.subr.mxu0 0.0
        %1571 = vmatpush1.msra.mxu0 0.0
        %1572 = vmatprep.subr.mxu0 0.0
        %1573 = vmatpush1.msra.mxu0 0.0
        %1574 = vmatprep.subr.mxu0 0.0
        %1575 = vmatpush1.msra.mxu0 0.0
        %1576 = vmatprep.subr.mxu0 0.0
        %1577 = vmatpush1.msra.mxu0 0.0
        %1578 = vmatprep.subr.mxu0 0.0
        %1579 = vmatpush1.msra.mxu0 0.0
        %1580 = vmatprep.subr.mxu0 0.0
        %1581 = vmatpush1.msra.mxu0 0.0
        %1582 = vmatprep.subr.mxu0 0.0
        %1583 = vmatpush1.msra.mxu0 0.0
        %1584 = vmatprep.subr.mxu0 0.0
        %1585 = vmatpush1.msra.mxu0 0.0
        %1586 = vmatprep.subr.mxu0 0.0
        %1587 = vmatpush1.msra.mxu0 0.0
        %1588 = vmatprep.subr.mxu0 0.0
        %1589 = vmatpush1.msra.mxu0 0.0
        %1590 = vmatprep.subr.mxu0 0.0
        %1591 = vmatpush1.msra.mxu0 0.0
        %1592 = vmatprep.subr.mxu0 0.0
        %1593 = vmatpush1.msra.mxu0 0.0
        %1594 = vmatprep.subr.mxu0 0.0
        %1595 = vmatpush1.msra.mxu0 0.0
        %1596 = vmatprep.subr.mxu0 0.0
        %1597 = vmatpush1.msra.mxu0 0.0
        %1598 = vmatprep.subr.mxu0 0.0
        %1599 = vmatpush1.msra.mxu0 %v1564
        %1600 = vmatprep.subr.mxu0 0.0
        %1601 = vmatpush2.msra.mxu0 0.0
        %1602 = vmatprep.subr.mxu0 0.0
        %1603 = vmatpush2.msra.mxu0 0.0
        %1604 = vmatprep.subr.mxu0 0.0
        %1605 = vmatpush2.msra.mxu0 0.0
        %1606 = vmatprep.subr.mxu0 0.0
        %1607 = vmatpush2.msra.mxu0 0.0
        %1608 = vmatprep.subr.mxu0 0.0
        %1609 = vmatpush2.msra.mxu0 0.0
        %1610 = vmatprep.subr.mxu0 0.0
        %1611 = vmatpush2.msra.mxu0 0.0
        %1612 = vmatprep.subr.mxu0 0.0
        %1613 = vmatpush2.msra.mxu0 0.0
        %1614 = vmatprep.subr.mxu0 0.0
        %1615 = vmatpush2.msra.mxu0 0.0
        %1616 = vmatprep.subr.mxu0 0.0
        %1617 = vmatpush2.msra.mxu0 0.0
        %1618 = vmatprep.subr.mxu0 0.0
        %1619 = vmatpush2.msra.mxu0 0.0
        %1620 = vmatprep.subr.mxu0 0.0
        %1621 = vmatpush2.msra.mxu0 0.0
        %1622 = vmatprep.subr.mxu0 0.0
        %1623 = vmatpush2.msra.mxu0 0.0
        %1624 = vmatprep.subr.mxu0 0.0
        %1625 = vmatpush2.msra.mxu0 0.0
        %1626 = vmatprep.subr.mxu0 0.0
        %1627 = vmatpush2.msra.mxu0 0.0
        %1628 = vmatprep.subr.mxu0 0.0
        %1629 = vmatpush2.msra.mxu0 0.0
        %1630 = vmatprep.subr.mxu0 0.0
        %1631 = vmatpush2.msra.mxu0 0.0
        %1632 = vmatprep.mubr.f32.mxu0 0.0
        %1633 = vmatmul.mubr.f32.gmra.mxu0 %v1566
        %v1634 = vpop.f32.mrf.mxu0
        %v1635 = vadd.f32 0.0, %v1634
        %v1636 = vpop.f32.mrf.mxu0
        %1637 = vdwg.mxu0
        %v1638 = vadd.f32 %v1398, %v1635
        %v1639 = vld [vmem:[%s8] sm:$0x1]
        %v1641 = vlaneseq
        %v1642 = vshrl.u32 %v1641, 7
        %v1643 = vsub.s32 0, %v1642
        %v1644 = vrot.slane %v1639, %v1643
        %v1646 = vadd.f32 %v1638, %v1644
        %1647 = vst.msk [vmem:[%s419] sm:$0xff] %vm607, %v1646
        %s1648 = sand.u32 %s244, 1
        %s1649 = scalar_lea.sflag [#allocation6], %s1648
        %s1650 = sand.u32 %s244, 1
        %s1651 = smul.addr %s1650, 8
        %s1652 = scalar_lea.vmem [#allocation13], %s1651
        // Predicated region
        $region81: #{tpu_custom_call.1} parent=55 // pred_check
          %p1653 = pneg %p254
        $region82: #{tpu_custom_call.1} parent=55 // pred_check_branch
          %1655 = sbr.rel (%p1653) target = $region84
        $region83: #{tpu_custom_call.1} parent=55 // pred_region
          %s1657 = ssub.s32 128, 128
          %1658 = vsyncadd %s1649, %s1657
          %s1659 = sadd.s32 %s33, %s32
          %s1660 = smul.addr %s1659, 128
          %s1661 = scalar_lea.hbm %s9, %s1660
          %s1663 = sshll.u32 %s1652, 4
          %s1664 = int_to_ptr.vmem [resolvable:$true] %s1663
          %1666 = dma.vmem_to_hbm [thread:$0]  %s1664, 128, %s1661, %s1649
        $region84: #{tpu_custom_call.1} parent=55 // pred_fallthru
          _
      $region56: #{tpu_custom_call.1} parent=5 // pred_fallthru
        _
      %p1667 = scmp.le.s32.totalorder 2, %s23
      // Predicated region
      $region85: #{tpu_custom_call.1} parent=5 // pred_check
        %p1668 = pneg %p1667
      $region86: #{tpu_custom_call.1} parent=5 // pred_check_branch
        %1670 = sbr.rel (%p1668) target = $region88
      $region87: #{tpu_custom_call.1} parent=5 // pred_region
        %s1671 = ssub.s32 %s23, 2
        // Predicated region
        $region89: #{tpu_custom_call.1} parent=87 // pred_check
          %p1672 = pneg %p260
        $region90: #{tpu_custom_call.1} parent=87 // pred_check_branch
          %1674 = sbr.rel (%p1672) target = $region92
        $region91: #{tpu_custom_call.1} parent=87 // pred_region
          %s1675 = sand.u32 %s245, 1
          %s1676 = scalar_lea.sflag [#allocation6], %s1675
          %s1677 = sand.u32 %s245, 1
          %s1678 = smul.addr %s1677, 8
          %s1679 = scalar_lea.vmem [#allocation13], %s1678
          %1680 = dma.done %s1676, 128
        $region92: #{tpu_custom_call.1} parent=87 // pred_fallthru
          _
      $region88: #{tpu_custom_call.1} parent=5 // pred_fallthru
        _
    $region6: #{tpu_custom_call.1} parent=1 // loop_footer
      %s27 = sadd.s32 1, %s23
    $region7: #{tpu_custom_call.1} parent=1 // loop_footer_branch
      %22 = sbr.rel target = $region3
    $region8: #{tpu_custom_call.1} parent=1 // loop_exit
      _
    %1681 = vsyncpa [#allocation5], 1
    %s1682 = scalar_lea.sflag [#allocation5], 1
    %1683 = vsyncpa %s1682, 1
    %1684 = vsyncpa [#allocation8], 1
    %1685 = vsyncpa [#allocation11], 1
    %1686 = vsyncpa [#allocation6], 1
    %s1687 = scalar_lea.sflag [#allocation6], 1
    %1688 = vsyncpa %s1687, 1

</llo_original>
